<compile_context>
chip_gen: v7x
topology: tpu7x:2x2x1
jax: 0.10.0
libtpu: 0.0.40
codegen_flags: <defaults>
</compile_context>

<pallas_src>
import functools

import jax
import jax.numpy as jnp
import numpy as np
from jax.experimental import pallas as pl
from jax.experimental.pallas import tpu as pltpu


def _recip(x):
    """EUP approximate reciprocal + one Newton-Raphson step (~f32 accurate)."""
    r = pl.reciprocal(x, approx=True)
    return r * (2.0 - x * r)


def mos_kernel(x_ref, wlp_ref, blp_ref, wd_ref, bd_ref, out_ref, *, n_k):
    """One batch tile of Mixture-of-Softmaxes.

    x_ref:   [TB, E]
    wlp_ref: [E, K*E + K]  fused latent|prior weight (lanes [0:K*E] latent,
    blp_ref: [1, K*E + K]                             lanes [K*E:] prior)
    wd_ref:  [E, V], bd_ref: [1, V]  decoder linear
    out_ref: [TB, V]  log mixture probabilities
    """
    tb = x_ref.shape[0]
    e = wd_ref.shape[0]
    ke = n_k * e

    x = x_ref[...].astype(jnp.float32)

    # One fused MXU dot for latent + prior projections (lane-dense output).
    y = (jnp.dot(x, wlp_ref[...], preferred_element_type=jnp.float32)
         + blp_ref[...])                                       # [TB, K*E + K]

    # Lane-dense tanh over [TB, K*E]; EUP is the binding unit at these shapes.
    # TODO(synk): dropout is identity here (inference mode / p effectively 0).
    lat = jnp.tanh(y[:, :ke])                                  # [TB, K*E]

    # Prior softmax over the K mixture components (tiny, K lanes).
    pr = y[:, ke:]                                             # [TB, K]
    pr = pr - jnp.max(pr, axis=-1, keepdims=True)
    pe = jnp.exp(pr)
    prior = pe * _recip(jnp.sum(pe, axis=-1, keepdims=True))   # [TB, K]

    # Lane->sublane reshuffle (XLU slot has slack): stack the K latent
    # components so the decoder is a single MXU dot with M = K*TB.
    lat_kb = jnp.concatenate(
        [lat[:, k * e:(k + 1) * e] for k in range(n_k)], axis=0)   # [K*TB, E]

    logits = (jnp.dot(lat_kb, wd_ref[...], preferred_element_type=jnp.float32)
              + bd_ref[...])                                   # [K*TB, V]
    logits = logits - jnp.max(logits, axis=-1, keepdims=True)
    ex = jnp.exp(logits)                                       # [K*TB, V]
    inv = _recip(jnp.sum(ex, axis=-1, keepdims=True))          # [K*TB, 1]

    # Fold the prior into the per-row softmax scale (one scale multiply per
    # row block) and reduce the mixture with K-1 sublane-block adds.
    prob = ex[0:tb] * (inv[0:tb] * prior[:, 0:1])
    for k in range(1, n_k):
        scale = inv[k * tb:(k + 1) * tb] * prior[:, k:k + 1]   # [TB, 1]
        prob = prob + ex[k * tb:(k + 1) * tb] * scale

    out_ref[...] = jnp.log(prob + 1e-8)


def _round_up(v, m):
    return ((v + m - 1) // m) * m


def _pick_tb(b):
    """Single tile on 1-TC chips (v5e/v6e); >= 2 parallel tiles on v7x."""
    try:
        kind = jax.devices()[0].device_kind.lower()
    except Exception:
        kind = ""
    n_tiles = 2 if ("v7" in kind or "7x" in kind) else 1
    return max(8, _round_up(-(-b // n_tiles), 8))


@functools.partial(jax.jit, static_argnames=("tb",))
def _mos_call(x, wl, bl, wp, bp, wd, bd, *, tb):
    b, e = x.shape
    n_k = wp.shape[1]
    v = wd.shape[1]

    # Fold the prior projection into the latent projection: one fused weight
    # [E, K*E + K]; the K*E / K split lands on a 128-lane vreg boundary here.
    wlp = jnp.concatenate([wl, wp], axis=1)          # [E, K*E + K]
    blp = jnp.concatenate([bl, bp], axis=1)          # [1, K*E + K]

    # Pad a ragged batch to a whole number of tiles; padded rows are dropped.
    n_tiles = pl.cdiv(b, tb)
    b_pad = n_tiles * tb
    if b_pad != b:
        x = jnp.pad(x, ((0, b_pad - b), (0, 0)))

    flops = (2 * b_pad * e * (n_k * e + n_k)         # fused latent|prior dot
             + 2 * b_pad * n_k * e * v               # fused decoder dot
             + 6 * b_pad * n_k * v)                  # softmax/mixture epilogue
    transcendentals = (b_pad * n_k * e               # tanh
                       + b_pad * n_k * v + b_pad * n_k   # exp
                       + b_pad * v)                  # log
    bytes_accessed = 4 * (b_pad * e + wlp.size + blp.size + wd.size + bd.size
                          + b_pad * v)

    out = pl.pallas_call(
        functools.partial(mos_kernel, n_k=int(n_k)),
        out_shape=jax.ShapeDtypeStruct((b_pad, v), jnp.float32),
        grid_spec=pltpu.PrefetchScalarGridSpec(
            num_scalar_prefetch=0,
            grid=(n_tiles,),
            in_specs=[
                pl.BlockSpec((tb, e), lambda i: (i, 0)),       # x tile
                pl.BlockSpec(wlp.shape, lambda i: (0, 0)),     # latent|prior W
                pl.BlockSpec(blp.shape, lambda i: (0, 0)),     # latent|prior b
                pl.BlockSpec(wd.shape, lambda i: (0, 0)),      # decoder W
                pl.BlockSpec(bd.shape, lambda i: (0, 0)),      # decoder b
            ],
            out_specs=pl.BlockSpec((tb, v), lambda i: (i, 0)),
        ),
        compiler_params=pltpu.CompilerParams(
            dimension_semantics=("parallel",)),
        cost_estimate=pl.CostEstimate(
            flops=flops,
            transcendentals=transcendentals,
            bytes_accessed=bytes_accessed),
    )(x, wlp, blp, wd, bd)
    return out[:b]


def mixture_of_softmaxes(x, wl, bl, wp, bp, wd, bd, *, tb=None):
    if tb is None:
        tb = _pick_tb(x.shape[0])
    tb = max(8, _round_up(int(tb), 8))   # keep f32 sublane-tile alignment
    return _mos_call(x, wl, bl, wp, bp, wd, bd, tb=tb)


def reference(x, wl, bl, wp, bp, wd, bd):
    """Plain-JAX reference mirroring the PyTorch forward."""
    e = x.shape[1]
    k = wp.shape[1]
    v = wd.shape[1]
    latent = jnp.tanh(x @ wl + bl[0])                     # [B, K*E]
    logit = latent.reshape(-1, e) @ wd + bd[0]            # [B*K, V]
    prior = jax.nn.softmax(x @ wp + bp[0], axis=-1)       # [B, K]
    prob = jax.nn.softmax(logit, axis=-1).reshape(-1, k, v)
    prob = (prob * prior[:, :, None]).sum(axis=1)
    return jnp.log(prob + 1e-8)


if __name__ == "__main__":
    # Model hyper-parameters (small, TPU-tile friendly).
    K = 4        # num_softmaxes
    V = 256      # ntoken
    E = 32       # embedding_size
    B = 64       # flattened leading dims (e.g. batch=8, seq=8)

    key = jax.random.PRNGKey(0)
    kx, k1, k2, k3, k4, k5, k6 = jax.random.split(key, 7)

    x = jax.random.normal(kx, (B, E), jnp.float32)

    # Deterministic parameter init (Linear weights stored [in, out]).
    scale = 1.0 / np.sqrt(E)
    wl = jax.random.uniform(k1, (E, K * E), jnp.float32, -scale, scale)
    bl = jax.random.uniform(k2, (1, K * E), jnp.float32, -scale, scale)
    wp = jax.random.uniform(k3, (E, K), jnp.float32, -scale, scale)
    bp = jax.random.uniform(k4, (1, K), jnp.float32, -scale, scale)
    wd = jax.random.uniform(k5, (E, V), jnp.float32, -scale, scale)
    bd = jax.random.uniform(k6, (1, V), jnp.float32, -scale, scale)

    # Main case: tb chosen per generation (single tile on v5e/v6e).
    out = mixture_of_softmaxes(x, wl, bl, wp, bp, wd, bd)
    out = jax.block_until_ready(out)
    ref = reference(x, wl, bl, wp, bp, wd, bd)
    np.testing.assert_allclose(np.asarray(out), np.asarray(ref),
                               rtol=1e-5, atol=1e-5)

    # Ragged batch + multi-tile grid path (padded rows dropped in wrapper).
    x2 = jax.random.normal(jax.random.PRNGKey(1), (50, E), jnp.float32)
    out2 = jax.block_until_ready(
        mixture_of_softmaxes(x2, wl, bl, wp, bp, wd, bd, tb=24))
    ref2 = reference(x2, wl, bl, wp, bp, wd, bd)
    np.testing.assert_allclose(np.asarray(out2), np.asarray(ref2),
                               rtol=1e-5, atol=1e-5)

    print("KERNEL_OK")
</pallas_src>

<mosaic_0001>
module attributes {stable_mosaic.version = 11 : i64} {
  func.func @mos_kernel(%arg0: i32, %arg1: memref<64x32xf32, #tpu.memory_space<vmem>>, %arg2: memref<32x132xf32, #tpu.memory_space<vmem>>, %arg3: memref<1x132xf32, #tpu.memory_space<vmem>>, %arg4: memref<32x256xf32, #tpu.memory_space<vmem>>, %arg5: memref<1x256xf32, #tpu.memory_space<vmem>>, %arg6: memref<64x256xf32, #tpu.memory_space<vmem>>) attributes {dimension_semantics = [#tpu.dimension_semantics<parallel>], iteration_bounds = array<i64: 1>, scalar_prefetch = 0 : i64, scratch_operands = 0 : i64, tpu.core_type = #tpu.core_type<tc>, window_params = [{transform_indices = @transform_0, window_bounds = array<i64: 64, 32>}, {pipeline_mode = #tpu.pipeline_mode<synchronous>, transform_indices = @transform_1, window_bounds = array<i64: 32, 132>}, {pipeline_mode = #tpu.pipeline_mode<synchronous>, transform_indices = @transform_2, window_bounds = array<i64: 1, 132>}, {pipeline_mode = #tpu.pipeline_mode<synchronous>, transform_indices = @transform_3, window_bounds = array<i64: 32, 256>}, {pipeline_mode = #tpu.pipeline_mode<synchronous>, transform_indices = @transform_4, window_bounds = array<i64: 1, 256>}, {transform_indices = @transform_5, window_bounds = array<i64: 64, 256>}]} {
    %c0 = arith.constant 0 : index
    %c0_0 = arith.constant 0 : index
    %0 = vector.load %arg1[%c0, %c0_0] : memref<64x32xf32, #tpu.memory_space<vmem>>, vector<64x32xf32>
    %c0_1 = arith.constant 0 : index
    %c0_2 = arith.constant 0 : index
    %1 = vector.load %arg2[%c0_1, %c0_2] : memref<32x132xf32, #tpu.memory_space<vmem>>, vector<32x132xf32>
    %cst = arith.constant dense<0.000000e+00> : vector<64x132xf32>
    %2 = tpu.matmul %0, %1, %cst {dimension_numbers = #tpu.dot_dimension_numbers<[1], [0], [0], [1], [0, 0, 1, 1], [], []>} : vector<64x32xf32>, vector<32x132xf32>, vector<64x132xf32> -> vector<64x132xf32>
    %c0_3 = arith.constant 0 : index
    %c0_4 = arith.constant 0 : index
    %3 = vector.load %arg3[%c0_3, %c0_4] : memref<1x132xf32, #tpu.memory_space<vmem>>, vector<1x132xf32>
    %4 = vector.broadcast %3 : vector<1x132xf32> to vector<64x132xf32>
    %5 = arith.addf %2, %4 : vector<64x132xf32>
    %6 = vector.extract_strided_slice %5 {offsets = [0, 0], sizes = [64, 128], strides = [1, 1]} : vector<64x132xf32> to vector<64x128xf32>
    %7 = math.tanh %6 : vector<64x128xf32>
    %8 = vector.extract_strided_slice %5 {offsets = [0, 128], sizes = [64, 4], strides = [1, 1]} : vector<64x132xf32> to vector<64x4xf32>
    %cst_5 = arith.constant dense<0xFF800000> : vector<64xf32>
    %9 = vector.multi_reduction <maximumf>, %8, %cst_5 [1] : vector<64x4xf32> to vector<64xf32>
    %10 = vector.shape_cast %9 : vector<64xf32> to vector<64x1xf32>
    %11 = vector.broadcast %10 : vector<64x1xf32> to vector<64x4xf32>
    %12 = arith.subf %8, %11 : vector<64x4xf32>
    %13 = math.exp %12 : vector<64x4xf32>
    %cst_6 = arith.constant dense<0.000000e+00> : vector<64xf32>
    %14 = vector.multi_reduction <add>, %13, %cst_6 [1] : vector<64x4xf32> to vector<64xf32>
    %15 = vector.shape_cast %14 : vector<64xf32> to vector<64x1xf32>
    %16 = tpu.reciprocal %15 {approx = true} : vector<64x1xf32> -> vector<64x1xf32>
    %17 = arith.mulf %15, %16 : vector<64x1xf32>
    %cst_7 = arith.constant 2.000000e+00 : f32
    %18 = vector.broadcast %cst_7 : f32 to vector<64x1xf32>
    %19 = arith.subf %18, %17 : vector<64x1xf32>
    %20 = arith.mulf %16, %19 : vector<64x1xf32>
    %21 = vector.broadcast %20 : vector<64x1xf32> to vector<64x4xf32>
    %22 = arith.mulf %13, %21 : vector<64x4xf32>
    %23 = vector.extract_strided_slice %7 {offsets = [0, 0], sizes = [64, 32], strides = [1, 1]} : vector<64x128xf32> to vector<64x32xf32>
    %24 = vector.extract_strided_slice %7 {offsets = [0, 32], sizes = [64, 32], strides = [1, 1]} : vector<64x128xf32> to vector<64x32xf32>
    %25 = vector.extract_strided_slice %7 {offsets = [0, 64], sizes = [64, 32], strides = [1, 1]} : vector<64x128xf32> to vector<64x32xf32>
    %26 = vector.extract_strided_slice %7 {offsets = [0, 96], sizes = [64, 32], strides = [1, 1]} : vector<64x128xf32> to vector<64x32xf32>
    %27 = tpu.concatenate %23, %24, %25, %26 in 0 : vector<64x32xf32>, vector<64x32xf32>, vector<64x32xf32>, vector<64x32xf32> -> vector<256x32xf32>
    %c0_8 = arith.constant 0 : index
    %c0_9 = arith.constant 0 : index
    %28 = vector.load %arg4[%c0_8, %c0_9] : memref<32x256xf32, #tpu.memory_space<vmem>>, vector<32x256xf32>
    %cst_10 = arith.constant dense<0.000000e+00> : vector<256x256xf32>
    %29 = tpu.matmul %27, %28, %cst_10 {dimension_numbers = #tpu.dot_dimension_numbers<[1], [0], [0], [1], [0, 0, 1, 1], [], []>} : vector<256x32xf32>, vector<32x256xf32>, vector<256x256xf32> -> vector<256x256xf32>
    %c0_11 = arith.constant 0 : index
    %c0_12 = arith.constant 0 : index
    %30 = vector.load %arg5[%c0_11, %c0_12] : memref<1x256xf32, #tpu.memory_space<vmem>>, vector<1x256xf32>
    %31 = vector.broadcast %30 : vector<1x256xf32> to vector<256x256xf32>
    %32 = arith.addf %29, %31 : vector<256x256xf32>
    %cst_13 = arith.constant dense<0xFF800000> : vector<256xf32>
    %33 = vector.multi_reduction <maximumf>, %32, %cst_13 [1] : vector<256x256xf32> to vector<256xf32>
    %34 = vector.shape_cast %33 : vector<256xf32> to vector<256x1xf32>
    %35 = vector.broadcast %34 : vector<256x1xf32> to vector<256x256xf32>
    %36 = arith.subf %32, %35 : vector<256x256xf32>
    %37 = math.exp %36 : vector<256x256xf32>
    %cst_14 = arith.constant dense<0.000000e+00> : vector<256xf32>
    %38 = vector.multi_reduction <add>, %37, %cst_14 [1] : vector<256x256xf32> to vector<256xf32>
    %39 = vector.shape_cast %38 : vector<256xf32> to vector<256x1xf32>
    %40 = tpu.reciprocal %39 {approx = true} : vector<256x1xf32> -> vector<256x1xf32>
    %41 = arith.mulf %39, %40 : vector<256x1xf32>
    %cst_15 = arith.constant 2.000000e+00 : f32
    %42 = vector.broadcast %cst_15 : f32 to vector<256x1xf32>
    %43 = arith.subf %42, %41 : vector<256x1xf32>
    %44 = arith.mulf %40, %43 : vector<256x1xf32>
    %45 = vector.extract_strided_slice %37 {offsets = [0, 0], sizes = [64, 256], strides = [1, 1]} : vector<256x256xf32> to vector<64x256xf32>
    %46 = vector.extract_strided_slice %44 {offsets = [0, 0], sizes = [64, 1], strides = [1, 1]} : vector<256x1xf32> to vector<64x1xf32>
    %47 = vector.extract_strided_slice %22 {offsets = [0, 0], sizes = [64, 1], strides = [1, 1]} : vector<64x4xf32> to vector<64x1xf32>
    %48 = arith.mulf %46, %47 : vector<64x1xf32>
    %49 = vector.broadcast %48 : vector<64x1xf32> to vector<64x256xf32>
    %50 = arith.mulf %45, %49 : vector<64x256xf32>
    %51 = vector.extract_strided_slice %44 {offsets = [64, 0], sizes = [64, 1], strides = [1, 1]} : vector<256x1xf32> to vector<64x1xf32>
    %52 = vector.extract_strided_slice %22 {offsets = [0, 1], sizes = [64, 1], strides = [1, 1]} : vector<64x4xf32> to vector<64x1xf32>
    %53 = arith.mulf %51, %52 : vector<64x1xf32>
    %54 = vector.extract_strided_slice %37 {offsets = [64, 0], sizes = [64, 256], strides = [1, 1]} : vector<256x256xf32> to vector<64x256xf32>
    %55 = vector.broadcast %53 : vector<64x1xf32> to vector<64x256xf32>
    %56 = arith.mulf %54, %55 : vector<64x256xf32>
    %57 = arith.addf %50, %56 : vector<64x256xf32>
    %58 = vector.extract_strided_slice %44 {offsets = [128, 0], sizes = [64, 1], strides = [1, 1]} : vector<256x1xf32> to vector<64x1xf32>
    %59 = vector.extract_strided_slice %22 {offsets = [0, 2], sizes = [64, 1], strides = [1, 1]} : vector<64x4xf32> to vector<64x1xf32>
    %60 = arith.mulf %58, %59 : vector<64x1xf32>
    %61 = vector.extract_strided_slice %37 {offsets = [128, 0], sizes = [64, 256], strides = [1, 1]} : vector<256x256xf32> to vector<64x256xf32>
    %62 = vector.broadcast %60 : vector<64x1xf32> to vector<64x256xf32>
    %63 = arith.mulf %61, %62 : vector<64x256xf32>
    %64 = arith.addf %57, %63 : vector<64x256xf32>
    %65 = vector.extract_strided_slice %44 {offsets = [192, 0], sizes = [64, 1], strides = [1, 1]} : vector<256x1xf32> to vector<64x1xf32>
    %66 = vector.extract_strided_slice %22 {offsets = [0, 3], sizes = [64, 1], strides = [1, 1]} : vector<64x4xf32> to vector<64x1xf32>
    %67 = arith.mulf %65, %66 : vector<64x1xf32>
    %68 = vector.extract_strided_slice %37 {offsets = [192, 0], sizes = [64, 256], strides = [1, 1]} : vector<256x256xf32> to vector<64x256xf32>
    %69 = vector.broadcast %67 : vector<64x1xf32> to vector<64x256xf32>
    %70 = arith.mulf %68, %69 : vector<64x256xf32>
    %71 = arith.addf %64, %70 : vector<64x256xf32>
    %cst_16 = arith.constant 9.99999993E-9 : f32
    %72 = vector.broadcast %cst_16 : f32 to vector<64x256xf32>
    %73 = arith.addf %71, %72 : vector<64x256xf32>
    %74 = math.log %73 : vector<64x256xf32>
    %c0_17 = arith.constant 0 : index
    %c0_18 = arith.constant 0 : index
    %75 = vector.load %arg6[%c0_17, %c0_18] : memref<64x256xf32, #tpu.memory_space<vmem>>, vector<64x256xf32>
    tpu.vector_store %arg6[%c0_17, %c0_18], %74 {strides = array<i32>} : memref<64x256xf32, #tpu.memory_space<vmem>>, vector<64x256xf32>,
    return
  }
  func.func @transform_0(%arg0: i32) -> (i32, i32) {
    %c0_i32 = arith.constant 0 : i32
    %c0_i32_0 = arith.constant 0 : i32
    return %arg0, %c0_i32 : i32, i32
  }
  func.func @transform_1(%arg0: i32) -> (i32, i32) {
    %c0_i32 = arith.constant 0 : i32
    %c0_i32_0 = arith.constant 0 : i32
    %c0_i32_1 = arith.constant 0 : i32
    return %c0_i32, %c0_i32_0 : i32, i32
  }
  func.func @transform_2(%arg0: i32) -> (i32, i32) {
    %c0_i32 = arith.constant 0 : i32
    %c0_i32_0 = arith.constant 0 : i32
    %c0_i32_1 = arith.constant 0 : i32
    return %c0_i32, %c0_i32_0 : i32, i32
  }
  func.func @transform_3(%arg0: i32) -> (i32, i32) {
    %c0_i32 = arith.constant 0 : i32
    %c0_i32_0 = arith.constant 0 : i32
    %c0_i32_1 = arith.constant 0 : i32
    return %c0_i32, %c0_i32_0 : i32, i32
  }
  func.func @transform_4(%arg0: i32) -> (i32, i32) {
    %c0_i32 = arith.constant 0 : i32
    %c0_i32_0 = arith.constant 0 : i32
    %c0_i32_1 = arith.constant 0 : i32
    return %c0_i32, %c0_i32_0 : i32, i32
  }
  func.func @transform_5(%arg0: i32) -> (i32, i32) {
    %c0_i32 = arith.constant 0 : i32
    %c0_i32_0 = arith.constant 0 : i32
    return %arg0, %c0_i32 : i32, i32
  }
}

</mosaic_0001>

<llo_original>
// kernel: _mos_call.1
$region0: #{_mos_call.1}
  #allocation0 [shape = 'u32[]', space=smem, size = 0x4, offset = 0x4, fixed_abs, tag = 'smem constant byte address 0x4 - core index']
  #allocation1 [shape = 'u32[144,128]{1,0:T(1,128)}', space=vmem, size = 0x12000, scoped, tag = 'internal scratch']
  %s0 = inlined_call_operand.vmem [shape: f32[64,32], index: 0, kind: input, shape index: {}]
  %s1 = inlined_call_operand.vmem [shape: f32[32,132], index: 1, kind: input, shape index: {}]
  %s2 = inlined_call_operand.vmem [shape: f32[1,132], index: 2, kind: input, shape index: {}]
  %s3 = inlined_call_operand.vmem [shape: f32[32,256], index: 3, kind: input, shape index: {}]
  %s4 = inlined_call_operand.vmem [shape: f32[1,256], index: 4, kind: input, shape index: {}]
  %s5 = inlined_call_operand.hbm [shape: f32[64,256], index: 5, kind: output, shape index: {}]
  %s6 = sld [smem:[#allocation0]]
  $region30: #{_mos_call.1} parent=0
    _
  %s8 = ssub.s32 1, %s6
  %s9 = scalar_select 0, %s8, %s6
  $region1: #{_mos_call.1} parent=0
    #allocation2 [shape = 'u8[65536]{0}', space=vmem, size = 0x10000, scoped, tag = 'output window, operand 0, single buffered']
    #allocation3 [shape = 's32[1]{0}', space=sflag, size = 0x4, scoped, tag = 'scoped memory for _mos_call.1']
    %10 = vsyncpa [#allocation3], 0
    // Predicated region
    $region2: #{_mos_call.1} parent=1 // pred_check
      _
    $region3: #{_mos_call.1} parent=1 // pred_check_branch
      %12 = sbr.rel (0) target = $region5
    $region4: #{_mos_call.1} parent=1 // pred_region
      _
    $region5: #{_mos_call.1} parent=1 // pred_fallthru
      _
    // Predicated region
    $region6: #{_mos_call.1} parent=1 // pred_check
      _
    $region7: #{_mos_call.1} parent=1 // pred_check_branch
      %14 = sbr.rel (0) target = $region9
    $region8: #{_mos_call.1} parent=1 // pred_region
      _
    $region9: #{_mos_call.1} parent=1 // pred_fallthru
      _
    // Predicated region
    $region10: #{_mos_call.1} parent=1 // pred_check
      _
    $region11: #{_mos_call.1} parent=1 // pred_check_branch
      %16 = sbr.rel (0) target = $region13
    $region12: #{_mos_call.1} parent=1 // pred_region
      _
    $region13: #{_mos_call.1} parent=1 // pred_fallthru
      _
    // Predicated region
    $region14: #{_mos_call.1} parent=1 // pred_check
      _
    $region15: #{_mos_call.1} parent=1 // pred_check_branch
      %18 = sbr.rel (0) target = $region17
    $region16: #{_mos_call.1} parent=1 // pred_region
      _
    $region17: #{_mos_call.1} parent=1 // pred_fallthru
      _
    // Predicated region
    $region18: #{_mos_call.1} parent=1 // pred_check
      _
    $region19: #{_mos_call.1} parent=1 // pred_check_branch
      %20 = sbr.rel (0) target = $region21
    $region20: #{_mos_call.1} parent=1 // pred_region
      _
    $region21: #{_mos_call.1} parent=1 // pred_fallthru
      _
    %v21 = vld [vmem:[%s0] sm:$0xff]
    %v22 = vld [vmem:[%s0 + $0x8] sm:$0xff]
    %v23 = vld [vmem:[%s0 + $0x10] sm:$0xff]
    %v24 = vld [vmem:[%s0 + $0x18] sm:$0xff]
    %v25 = vld [vmem:[%s0 + $0x20] sm:$0xff]
    %v26 = vld [vmem:[%s0 + $0x28] sm:$0xff]
    %v27 = vld [vmem:[%s0 + $0x30] sm:$0xff]
    %v28 = vld [vmem:[%s0 + $0x38] sm:$0xff]
    %v29 = vld [vmem:[%s1] sm:$0xff]
    %v30 = vld [vmem:[%s1 + $0x8] sm:$0xff]
    %v31 = vld [vmem:[%s1 + $0x10] sm:$0xff]
    %v32 = vld [vmem:[%s1 + $0x18] sm:$0xff]
    %v33 = vld [vmem:[%s1 + $0x20] sm:$0xff]
    %v34 = vld [vmem:[%s1 + $0x28] sm:$0xff]
    %v35 = vld [vmem:[%s1 + $0x30] sm:$0xff]
    %v36 = vld [vmem:[%s1 + $0x38] sm:$0xff]
    %v37 = vld [vmem:[%s2] sm:$0x3]
    %v39 = vlaneseq
    %v40 = vshrl.u32 %v39, 7
    %v41 = vsub.s32 0, %v40
    %v42 = vrot.slane %v37, %v41
    %v43 = vlaneseq
    %v44 = vshrl.u32 %v43, 7
    %v45 = vsub.s32 1, %v44
    %v46 = vrot.slane %v37, %v45
    %vm49 = vcmask 261120
    %v51 = vsel %vm49, %v21, 0
    %v54 = vsel %vm49, %v22, 0
    %v57 = vsel %vm49, %v23, 0
    %v60 = vsel %vm49, %v24, 0
    %v63 = vsel %vm49, %v25, 0
    %v66 = vsel %vm49, %v26, 0
    %v69 = vsel %vm49, %v27, 0
    %v72 = vsel %vm49, %v28, 0
    %74 = vmatprep.subr.mxu0 %v30
    %75 = vmatpush1.msra.mxu0 %v29
    %76 = vmatprep.subr.mxu0 %v32
    %77 = vmatpush1.msra.mxu0 %v31
    %78 = vmatprep.subr.mxu0 %v34
    %79 = vmatpush1.msra.mxu0 %v33
    %80 = vmatprep.subr.mxu0 %v36
    %81 = vmatpush1.msra.mxu0 %v35
    %82 = vmatprep.subr.mxu0 0.0
    %83 = vmatpush1.msra.mxu0 0.0
    %84 = vmatprep.subr.mxu0 0.0
    %85 = vmatpush1.msra.mxu0 0.0
    %86 = vmatprep.subr.mxu0 0.0
    %87 = vmatpush1.msra.mxu0 0.0
    %88 = vmatprep.subr.mxu0 0.0
    %89 = vmatpush1.msra.mxu0 0.0
    %90 = vmatprep.subr.mxu0 0.0
    %91 = vmatpush1.msra.mxu0 0.0
    %92 = vmatprep.subr.mxu0 0.0
    %93 = vmatpush1.msra.mxu0 0.0
    %94 = vmatprep.subr.mxu0 0.0
    %95 = vmatpush1.msra.mxu0 0.0
    %96 = vmatprep.subr.mxu0 0.0
    %97 = vmatpush1.msra.mxu0 0.0
    %98 = vmatprep.subr.mxu0 0.0
    %99 = vmatpush1.msra.mxu0 0.0
    %100 = vmatprep.subr.mxu0 0.0
    %101 = vmatpush1.msra.mxu0 0.0
    %102 = vmatprep.subr.mxu0 0.0
    %103 = vmatpush1.msra.mxu0 0.0
    %104 = vmatprep.subr.mxu0 0.0
    %105 = vmatpush1.msra.mxu0 0.0
    %106 = vmatprep.subr.mxu0 0.0
    %107 = vmatpush1.msra.mxu0 0.0
    %108 = vmatprep.subr.mxu0 0.0
    %109 = vmatpush1.msra.mxu0 0.0
    %110 = vmatprep.subr.mxu0 0.0
    %111 = vmatpush1.msra.mxu0 0.0
    %112 = vmatprep.subr.mxu0 0.0
    %113 = vmatpush1.msra.mxu0 0.0
    %114 = vmatprep.subr.mxu0 0.0
    %115 = vmatpush1.msra.mxu0 0.0
    %116 = vmatprep.subr.mxu0 0.0
    %117 = vmatpush1.msra.mxu0 0.0
    %118 = vmatprep.subr.mxu0 0.0
    %119 = vmatpush1.msra.mxu0 0.0
    %120 = vmatprep.subr.mxu0 0.0
    %121 = vmatpush1.msra.mxu0 0.0
    %122 = vmatprep.subr.mxu0 0.0
    %123 = vmatpush1.msra.mxu0 0.0
    %124 = vmatprep.subr.mxu0 0.0
    %125 = vmatpush1.msra.mxu0 0.0
    %126 = vmatprep.subr.mxu0 0.0
    %127 = vmatpush1.msra.mxu0 0.0
    %128 = vmatprep.subr.mxu0 0.0
    %129 = vmatpush1.msra.mxu0 0.0
    %130 = vmatprep.subr.mxu0 0.0
    %131 = vmatpush1.msra.mxu0 0.0
    %132 = vmatprep.subr.mxu0 0.0
    %133 = vmatpush1.msra.mxu0 0.0
    %134 = vmatprep.subr.mxu0 0.0
    %135 = vmatpush1.msra.mxu0 0.0
    %136 = vmatprep.subr.mxu0 0.0
    %137 = vmatpush1.msra.mxu0 0.0
    %138 = vmatprep.mubr.f32.mxu0 0.0
    %139 = vmatmul.mubr.f32.gmra.mrb[0].mxu0 %v51
    %v140 = vpop.f32.mrb[0].mxu0
    %v141 = vadd.f32 %v42, %v140
    %v142 = vpop.f32.mrb[0].mxu0
    %v143 = vadd.f32 %v46, %v142
    %144 = vmatprep.mubr.f32.mxu0 0.0
    %145 = vmatmul.mubr.f32.gmra.mrb[0].mxu0 %v54
    %v146 = vpop.f32.mrb[0].mxu0
    %v147 = vadd.f32 %v42, %v146
    %v148 = vpop.f32.mrb[0].mxu0
    %v149 = vadd.f32 %v46, %v148
    %150 = vmatprep.mubr.f32.mxu0 0.0
    %151 = vmatmul.mubr.f32.gmra.mrb[0].mxu0 %v57
    %v152 = vpop.f32.mrb[0].mxu0
    %v153 = vadd.f32 %v42, %v152
    %v154 = vpop.f32.mrb[0].mxu0
    %v155 = vadd.f32 %v46, %v154
    %156 = vmatprep.mubr.f32.mxu0 0.0
    %157 = vmatmul.mubr.f32.gmra.mrb[0].mxu0 %v60
    %v158 = vpop.f32.mrb[0].mxu0
    %v159 = vadd.f32 %v42, %v158
    %v160 = vpop.f32.mrb[0].mxu0
    %v161 = vadd.f32 %v46, %v160
    %162 = vmatprep.mubr.f32.mxu0 0.0
    %163 = vmatmul.mubr.f32.gmra.mrb[0].mxu0 %v63
    %v164 = vpop.f32.mrb[0].mxu0
    %v165 = vadd.f32 %v42, %v164
    %v166 = vpop.f32.mrb[0].mxu0
    %v167 = vadd.f32 %v46, %v166
    %168 = vmatprep.mubr.f32.mxu0 0.0
    %169 = vmatmul.mubr.f32.gmra.mrb[0].mxu0 %v66
    %v170 = vpop.f32.mrb[0].mxu0
    %v171 = vadd.f32 %v42, %v170
    %v172 = vpop.f32.mrb[0].mxu0
    %v173 = vadd.f32 %v46, %v172
    %174 = vmatprep.mubr.f32.mxu0 0.0
    %175 = vmatmul.mubr.f32.gmra.mrb[0].mxu0 %v69
    %v176 = vpop.f32.mrb[0].mxu0
    %v177 = vadd.f32 %v42, %v176
    %v178 = vpop.f32.mrb[0].mxu0
    %v179 = vadd.f32 %v46, %v178
    %180 = vmatprep.mubr.f32.mxu0 0.0
    %181 = vmatmul.mubr.f32.gmra.mrb[0].mxu0 %v72
    %v182 = vpop.f32.mrb[0].mxu0
    %v183 = vadd.f32 %v42, %v182
    %v184 = vpop.f32.mrb[0].mxu0
    %v185 = vadd.f32 %v46, %v184
    %186 = vdwg.mxu0
    %v187 = vtanh.pop %v141
    %v188 = vtanh.pop %v147
    %v189 = vtanh.pop %v153
    %v190 = vtanh.pop %v159
    %v191 = vtanh.pop %v165
    %v192 = vtanh.pop %v171
    %v193 = vtanh.pop %v177
    %v194 = vtanh.pop %v183
    %vm195 = vcmask 31744
    %v196 = vsel %vm195, %v143, -inf
    %197 = vmax.xlane.f32.xlu0 %v196
    %v198 = vpop.xlane.xlu0 %197
    %v199 = vsel %vm195, %v149, -inf
    %200 = vmax.xlane.f32.xlu0 %v199
    %v201 = vpop.xlane.xlu0 %200
    %v202 = vsel %vm195, %v155, -inf
    %203 = vmax.xlane.f32.xlu0 %v202
    %v204 = vpop.xlane.xlu0 %203
    %v205 = vsel %vm195, %v161, -inf
    %206 = vmax.xlane.f32.xlu0 %v205
    %v207 = vpop.xlane.xlu0 %206
    %v208 = vsel %vm195, %v167, -inf
    %209 = vmax.xlane.f32.xlu0 %v208
    %v210 = vpop.xlane.xlu0 %209
    %v211 = vsel %vm195, %v173, -inf
    %212 = vmax.xlane.f32.xlu0 %v211
    %v213 = vpop.xlane.xlu0 %212
    %v214 = vsel %vm195, %v179, -inf
    %215 = vmax.xlane.f32.xlu0 %v214
    %v216 = vpop.xlane.xlu0 %215
    %v217 = vsel %vm195, %v185, -inf
    %218 = vmax.xlane.f32.xlu0 %v217
    %v219 = vpop.xlane.xlu0 %218
    %v220 = vsub.f32 %v143, %v198
    %v221 = vsub.f32 %v149, %v201
    %v222 = vsub.f32 %v155, %v204
    %v223 = vsub.f32 %v161, %v207
    %v224 = vsub.f32 %v167, %v210
    %v225 = vsub.f32 %v173, %v213
    %v226 = vsub.f32 %v179, %v216
    %v227 = vsub.f32 %v185, %v219
    %v228 = vmul.f32 %v220, 1.442695
    %v229 = vpow.pop %v228
    %v230 = vmul.f32 %v221, 1.442695
    %v231 = vpow.pop %v230
    %v232 = vmul.f32 %v222, 1.442695
    %v233 = vpow.pop %v232
    %v234 = vmul.f32 %v223, 1.442695
    %v235 = vpow.pop %v234
    %v236 = vmul.f32 %v224, 1.442695
    %v237 = vpow.pop %v236
    %v238 = vmul.f32 %v225, 1.442695
    %v239 = vpow.pop %v238
    %v240 = vmul.f32 %v226, 1.442695
    %v241 = vpow.pop %v240
    %v242 = vmul.f32 %v227, 1.442695
    %v243 = vpow.pop %v242
    %v244 = vsel %vm195, %v229, 0.0
    %245 = vadd.xlane.f32.xlu0 %v244
    %v246 = vpop.xlane.xlu0 %245
    %v247 = vsel %vm195, %v231, 0.0
    %248 = vadd.xlane.f32.xlu0 %v247
    %v249 = vpop.xlane.xlu0 %248
    %v250 = vsel %vm195, %v233, 0.0
    %251 = vadd.xlane.f32.xlu0 %v250
    %v252 = vpop.xlane.xlu0 %251
    %v253 = vsel %vm195, %v235, 0.0
    %254 = vadd.xlane.f32.xlu0 %v253
    %v255 = vpop.xlane.xlu0 %254
    %v256 = vsel %vm195, %v237, 0.0
    %257 = vadd.xlane.f32.xlu0 %v256
    %v258 = vpop.xlane.xlu0 %257
    %v259 = vsel %vm195, %v239, 0.0
    %260 = vadd.xlane.f32.xlu0 %v259
    %v261 = vpop.xlane.xlu0 %260
    %v262 = vsel %vm195, %v241, 0.0
    %263 = vadd.xlane.f32.xlu0 %v262
    %v264 = vpop.xlane.xlu0 %263
    %v265 = vsel %vm195, %v243, 0.0
    %266 = vadd.xlane.f32.xlu0 %v265
    %v267 = vpop.xlane.xlu0 %266
    %v268 = vrcp.pop %v246
    %v269 = vrcp.pop %v249
    %v270 = vrcp.pop %v252
    %v271 = vrcp.pop %v255
    %v272 = vrcp.pop %v258
    %v273 = vrcp.pop %v261
    %v274 = vrcp.pop %v264
    %v275 = vrcp.pop %v267
    %v276 = vmul.f32 %v246, %v268
    %v277 = vmul.f32 %v249, %v269
    %v278 = vmul.f32 %v252, %v270
    %v279 = vmul.f32 %v255, %v271
    %v280 = vmul.f32 %v258, %v272
    %v281 = vmul.f32 %v261, %v273
    %v282 = vmul.f32 %v264, %v274
    %v283 = vmul.f32 %v267, %v275
    %v284 = vsub.f32 2.0, %v276
    %v285 = vsub.f32 2.0, %v277
    %v286 = vsub.f32 2.0, %v278
    %v287 = vsub.f32 2.0, %v279
    %v288 = vsub.f32 2.0, %v280
    %v289 = vsub.f32 2.0, %v281
    %v290 = vsub.f32 2.0, %v282
    %v291 = vsub.f32 2.0, %v283
    %v292 = vmul.f32 %v268, %v284
    %v293 = vmul.f32 %v269, %v285
    %v294 = vmul.f32 %v270, %v286
    %v295 = vmul.f32 %v271, %v287
    %v296 = vmul.f32 %v272, %v288
    %v297 = vmul.f32 %v273, %v289
    %v298 = vmul.f32 %v274, %v290
    %v299 = vmul.f32 %v275, %v291
    %v300 = vmul.f32 %v229, %v292
    %v301 = vmul.f32 %v231, %v293
    %v302 = vmul.f32 %v233, %v294
    %v303 = vmul.f32 %v235, %v295
    %v304 = vmul.f32 %v237, %v296
    %v305 = vmul.f32 %v239, %v297
    %v306 = vmul.f32 %v241, %v298
    %v307 = vmul.f32 %v243, %v299
    %316 = vrot.lane.b32.xlu0 %v187, 96
    %v317 = vpop.permute.xlu0 %316
    %318 = vrot.lane.b32.xlu0 %v188, 96
    %v319 = vpop.permute.xlu0 %318
    %320 = vrot.lane.b32.xlu0 %v189, 96
    %v321 = vpop.permute.xlu0 %320
    %322 = vrot.lane.b32.xlu0 %v190, 96
    %v323 = vpop.permute.xlu0 %322
    %324 = vrot.lane.b32.xlu0 %v191, 96
    %v325 = vpop.permute.xlu0 %324
    %326 = vrot.lane.b32.xlu0 %v192, 96
    %v327 = vpop.permute.xlu0 %326
    %328 = vrot.lane.b32.xlu0 %v193, 96
    %v329 = vpop.permute.xlu0 %328
    %330 = vrot.lane.b32.xlu0 %v194, 96
    %v331 = vpop.permute.xlu0 %330
    %332 = vrot.lane.b32.xlu0 %v187, 64
    %v333 = vpop.permute.xlu0 %332
    %334 = vrot.lane.b32.xlu0 %v188, 64
    %v335 = vpop.permute.xlu0 %334
    %336 = vrot.lane.b32.xlu0 %v189, 64
    %v337 = vpop.permute.xlu0 %336
    %338 = vrot.lane.b32.xlu0 %v190, 64
    %v339 = vpop.permute.xlu0 %338
    %340 = vrot.lane.b32.xlu0 %v191, 64
    %v341 = vpop.permute.xlu0 %340
    %342 = vrot.lane.b32.xlu0 %v192, 64
    %v343 = vpop.permute.xlu0 %342
    %344 = vrot.lane.b32.xlu0 %v193, 64
    %v345 = vpop.permute.xlu0 %344
    %346 = vrot.lane.b32.xlu0 %v194, 64
    %v347 = vpop.permute.xlu0 %346
    %348 = vrot.lane.b32.xlu0 %v187, 32
    %v349 = vpop.permute.xlu0 %348
    %350 = vrot.lane.b32.xlu0 %v188, 32
    %v351 = vpop.permute.xlu0 %350
    %352 = vrot.lane.b32.xlu0 %v189, 32
    %v353 = vpop.permute.xlu0 %352
    %354 = vrot.lane.b32.xlu0 %v190, 32
    %v355 = vpop.permute.xlu0 %354
    %356 = vrot.lane.b32.xlu0 %v191, 32
    %v357 = vpop.permute.xlu0 %356
    %358 = vrot.lane.b32.xlu0 %v192, 32
    %v359 = vpop.permute.xlu0 %358
    %360 = vrot.lane.b32.xlu0 %v193, 32
    %v361 = vpop.permute.xlu0 %360
    %362 = vrot.lane.b32.xlu0 %v194, 32
    %v363 = vpop.permute.xlu0 %362
    %v364 = vld [vmem:[%s3] sm:$0xff]
    %v365 = vld [vmem:[%s3 + $0x8] sm:$0xff]
    %v366 = vld [vmem:[%s3 + $0x10] sm:$0xff]
    %v367 = vld [vmem:[%s3 + $0x18] sm:$0xff]
    %v368 = vld [vmem:[%s3 + $0x20] sm:$0xff]
    %v369 = vld [vmem:[%s3 + $0x28] sm:$0xff]
    %v370 = vld [vmem:[%s3 + $0x30] sm:$0xff]
    %v371 = vld [vmem:[%s3 + $0x38] sm:$0xff]
    %v372 = vld [vmem:[%s4] sm:$0x3]
    %v374 = vlaneseq
    %v375 = vshrl.u32 %v374, 7
    %v376 = vsub.s32 0, %v375
    %v377 = vrot.slane %v372, %v376
    %v378 = vlaneseq
    %v379 = vshrl.u32 %v378, 7
    %v380 = vsub.s32 1, %v379
    %v381 = vrot.slane %v372, %v380
    %v384 = vsel %vm49, %v187, 0
    %v386 = vsel %vm49, %v188, 0
    %v388 = vsel %vm49, %v189, 0
    %v390 = vsel %vm49, %v190, 0
    %v392 = vsel %vm49, %v191, 0
    %v394 = vsel %vm49, %v192, 0
    %v396 = vsel %vm49, %v193, 0
    %v398 = vsel %vm49, %v194, 0
    %v400 = vsel %vm49, %v317, 0
    %v402 = vsel %vm49, %v319, 0
    %v404 = vsel %vm49, %v321, 0
    %v406 = vsel %vm49, %v323, 0
    %v408 = vsel %vm49, %v325, 0
    %v410 = vsel %vm49, %v327, 0
    %v412 = vsel %vm49, %v329, 0
    %v414 = vsel %vm49, %v331, 0
    %v416 = vsel %vm49, %v333, 0
    %v418 = vsel %vm49, %v335, 0
    %v420 = vsel %vm49, %v337, 0
    %v422 = vsel %vm49, %v339, 0
    %v424 = vsel %vm49, %v341, 0
    %v426 = vsel %vm49, %v343, 0
    %v428 = vsel %vm49, %v345, 0
    %v430 = vsel %vm49, %v347, 0
    %v432 = vsel %vm49, %v349, 0
    %v434 = vsel %vm49, %v351, 0
    %v436 = vsel %vm49, %v353, 0
    %v438 = vsel %vm49, %v355, 0
    %v440 = vsel %vm49, %v357, 0
    %v442 = vsel %vm49, %v359, 0
    %v444 = vsel %vm49, %v361, 0
    %v446 = vsel %vm49, %v363, 0
    %448 = vmatprep.subr.mxu0 %v365
    %449 = vmatpush1.msra.mxu0 %v364
    %450 = vmatprep.subr.mxu0 %v367
    %451 = vmatpush1.msra.mxu0 %v366
    %452 = vmatprep.subr.mxu0 %v369
    %453 = vmatpush1.msra.mxu0 %v368
    %454 = vmatprep.subr.mxu0 %v371
    %455 = vmatpush1.msra.mxu0 %v370
    %456 = vmatprep.subr.mxu0 0.0
    %457 = vmatpush1.msra.mxu0 0.0
    %458 = vmatprep.subr.mxu0 0.0
    %459 = vmatpush1.msra.mxu0 0.0
    %460 = vmatprep.subr.mxu0 0.0
    %461 = vmatpush1.msra.mxu0 0.0
    %462 = vmatprep.subr.mxu0 0.0
    %463 = vmatpush1.msra.mxu0 0.0
    %464 = vmatprep.subr.mxu0 0.0
    %465 = vmatpush1.msra.mxu0 0.0
    %466 = vmatprep.subr.mxu0 0.0
    %467 = vmatpush1.msra.mxu0 0.0
    %468 = vmatprep.subr.mxu0 0.0
    %469 = vmatpush1.msra.mxu0 0.0
    %470 = vmatprep.subr.mxu0 0.0
    %471 = vmatpush1.msra.mxu0 0.0
    %472 = vmatprep.subr.mxu0 0.0
    %473 = vmatpush1.msra.mxu0 0.0
    %474 = vmatprep.subr.mxu0 0.0
    %475 = vmatpush1.msra.mxu0 0.0
    %476 = vmatprep.subr.mxu0 0.0
    %477 = vmatpush1.msra.mxu0 0.0
    %478 = vmatprep.subr.mxu0 0.0
    %479 = vmatpush1.msra.mxu0 0.0
    %480 = vmatprep.subr.mxu0 0.0
    %481 = vmatpush1.msra.mxu0 0.0
    %482 = vmatprep.subr.mxu0 0.0
    %483 = vmatpush1.msra.mxu0 0.0
    %484 = vmatprep.subr.mxu0 0.0
    %485 = vmatpush1.msra.mxu0 0.0
    %486 = vmatprep.subr.mxu0 0.0
    %487 = vmatpush1.msra.mxu0 0.0
    %488 = vmatprep.subr.mxu0 0.0
    %489 = vmatpush1.msra.mxu0 0.0
    %490 = vmatprep.subr.mxu0 0.0
    %491 = vmatpush1.msra.mxu0 0.0
    %492 = vmatprep.subr.mxu0 0.0
    %493 = vmatpush1.msra.mxu0 0.0
    %494 = vmatprep.subr.mxu0 0.0
    %495 = vmatpush1.msra.mxu0 0.0
    %496 = vmatprep.subr.mxu0 0.0
    %497 = vmatpush1.msra.mxu0 0.0
    %498 = vmatprep.subr.mxu0 0.0
    %499 = vmatpush1.msra.mxu0 0.0
    %500 = vmatprep.subr.mxu0 0.0
    %501 = vmatpush1.msra.mxu0 0.0
    %502 = vmatprep.subr.mxu0 0.0
    %503 = vmatpush1.msra.mxu0 0.0
    %504 = vmatprep.subr.mxu0 0.0
    %505 = vmatpush1.msra.mxu0 0.0
    %506 = vmatprep.subr.mxu0 0.0
    %507 = vmatpush1.msra.mxu0 0.0
    %508 = vmatprep.subr.mxu0 0.0
    %509 = vmatpush1.msra.mxu0 0.0
    %510 = vmatprep.subr.mxu0 0.0
    %511 = vmatpush1.msra.mxu0 0.0
    %512 = vmatprep.mubr.f32.mxu0 0.0
    %513 = vmatmul.mubr.f32.gmra.mrb[0].mxu0 %v384
    %v514 = vpop.f32.mrb[0].mxu0
    %v515 = vadd.f32 %v377, %v514
    %v516 = vpop.f32.mrb[0].mxu0
    %v517 = vadd.f32 %v381, %v516
    %518 = vmatprep.mubr.f32.mxu0 0.0
    %519 = vmatmul.mubr.f32.gmra.mrb[0].mxu0 %v386
    %v520 = vpop.f32.mrb[0].mxu0
    %v521 = vadd.f32 %v377, %v520
    %v522 = vpop.f32.mrb[0].mxu0
    %v523 = vadd.f32 %v381, %v522
    %524 = vmatprep.mubr.f32.mxu0 0.0
    %525 = vmatmul.mubr.f32.gmra.mrb[0].mxu0 %v388
    %v526 = vpop.f32.mrb[0].mxu0
    %v527 = vadd.f32 %v377, %v526
    %v528 = vpop.f32.mrb[0].mxu0
    %v529 = vadd.f32 %v381, %v528
    %530 = vmatprep.mubr.f32.mxu0 0.0
    %531 = vmatmul.mubr.f32.gmra.mrb[0].mxu0 %v390
    %v532 = vpop.f32.mrb[0].mxu0
    %v533 = vadd.f32 %v377, %v532
    %v534 = vpop.f32.mrb[0].mxu0
    %v535 = vadd.f32 %v381, %v534
    %536 = vmatprep.mubr.f32.mxu0 0.0
    %537 = vmatmul.mubr.f32.gmra.mrb[0].mxu0 %v392
    %v538 = vpop.f32.mrb[0].mxu0
    %v539 = vadd.f32 %v377, %v538
    %v540 = vpop.f32.mrb[0].mxu0
    %v541 = vadd.f32 %v381, %v540
    %542 = vmatprep.mubr.f32.mxu0 0.0
    %543 = vmatmul.mubr.f32.gmra.mrb[0].mxu0 %v394
    %v544 = vpop.f32.mrb[0].mxu0
    %v545 = vadd.f32 %v377, %v544
    %v546 = vpop.f32.mrb[0].mxu0
    %v547 = vadd.f32 %v381, %v546
    %548 = vmatprep.mubr.f32.mxu0 0.0
    %549 = vmatmul.mubr.f32.gmra.mrb[0].mxu0 %v396
    %v550 = vpop.f32.mrb[0].mxu0
    %v551 = vadd.f32 %v377, %v550
    %v552 = vpop.f32.mrb[0].mxu0
    %v553 = vadd.f32 %v381, %v552
    %554 = vmatprep.mubr.f32.mxu0 0.0
    %555 = vmatmul.mubr.f32.gmra.mrb[0].mxu0 %v398
    %v556 = vpop.f32.mrb[0].mxu0
    %v557 = vadd.f32 %v377, %v556
    %v558 = vpop.f32.mrb[0].mxu0
    %v559 = vadd.f32 %v381, %v558
    %560 = vmatprep.mubr.f32.mxu0 0.0
    %561 = vmatmul.mubr.f32.gmra.mrb[0].mxu0 %v400
    %v562 = vpop.f32.mrb[0].mxu0
    %v563 = vadd.f32 %v377, %v562
    %v564 = vpop.f32.mrb[0].mxu0
    %v565 = vadd.f32 %v381, %v564
    %566 = vmatprep.mubr.f32.mxu0 0.0
    %567 = vmatmul.mubr.f32.gmra.mrb[0].mxu0 %v402
    %v568 = vpop.f32.mrb[0].mxu0
    %v569 = vadd.f32 %v377, %v568
    %v570 = vpop.f32.mrb[0].mxu0
    %v571 = vadd.f32 %v381, %v570
    %572 = vmatprep.mubr.f32.mxu0 0.0
    %573 = vmatmul.mubr.f32.gmra.mrb[0].mxu0 %v404
    %v574 = vpop.f32.mrb[0].mxu0
    %v575 = vadd.f32 %v377, %v574
    %v576 = vpop.f32.mrb[0].mxu0
    %v577 = vadd.f32 %v381, %v576
    %578 = vmatprep.mubr.f32.mxu0 0.0
    %579 = vmatmul.mubr.f32.gmra.mrb[0].mxu0 %v406
    %v580 = vpop.f32.mrb[0].mxu0
    %v581 = vadd.f32 %v377, %v580
    %v582 = vpop.f32.mrb[0].mxu0
    %v583 = vadd.f32 %v381, %v582
    %584 = vmatprep.mubr.f32.mxu0 0.0
    %585 = vmatmul.mubr.f32.gmra.mrb[0].mxu0 %v408
    %v586 = vpop.f32.mrb[0].mxu0
    %v587 = vadd.f32 %v377, %v586
    %v588 = vpop.f32.mrb[0].mxu0
    %v589 = vadd.f32 %v381, %v588
    %590 = vmatprep.mubr.f32.mxu0 0.0
    %591 = vmatmul.mubr.f32.gmra.mrb[0].mxu0 %v410
    %v592 = vpop.f32.mrb[0].mxu0
    %v593 = vadd.f32 %v377, %v592
    %v594 = vpop.f32.mrb[0].mxu0
    %v595 = vadd.f32 %v381, %v594
    %596 = vmatprep.mubr.f32.mxu0 0.0
    %597 = vmatmul.mubr.f32.gmra.mrb[0].mxu0 %v412
    %v598 = vpop.f32.mrb[0].mxu0
    %v599 = vadd.f32 %v377, %v598
    %v600 = vpop.f32.mrb[0].mxu0
    %v601 = vadd.f32 %v381, %v600
    %602 = vmatprep.mubr.f32.mxu0 0.0
    %603 = vmatmul.mubr.f32.gmra.mrb[0].mxu0 %v414
    %v604 = vpop.f32.mrb[0].mxu0
    %v605 = vadd.f32 %v377, %v604
    %v606 = vpop.f32.mrb[0].mxu0
    %v607 = vadd.f32 %v381, %v606
    %608 = vmatprep.mubr.f32.mxu0 0.0
    %609 = vmatmul.mubr.f32.gmra.mrb[0].mxu0 %v416
    %v610 = vpop.f32.mrb[0].mxu0
    %v611 = vadd.f32 %v377, %v610
    %v612 = vpop.f32.mrb[0].mxu0
    %v613 = vadd.f32 %v381, %v612
    %614 = vmatprep.mubr.f32.mxu0 0.0
    %615 = vmatmul.mubr.f32.gmra.mrb[0].mxu0 %v418
    %v616 = vpop.f32.mrb[0].mxu0
    %v617 = vadd.f32 %v377, %v616
    %v618 = vpop.f32.mrb[0].mxu0
    %v619 = vadd.f32 %v381, %v618
    %620 = vmatprep.mubr.f32.mxu0 0.0
    %621 = vmatmul.mubr.f32.gmra.mrb[0].mxu0 %v420
    %v622 = vpop.f32.mrb[0].mxu0
    %v623 = vadd.f32 %v377, %v622
    %v624 = vpop.f32.mrb[0].mxu0
    %v625 = vadd.f32 %v381, %v624
    %626 = vmatprep.mubr.f32.mxu0 0.0
    %627 = vmatmul.mubr.f32.gmra.mrb[0].mxu0 %v422
    %v628 = vpop.f32.mrb[0].mxu0
    %v629 = vadd.f32 %v377, %v628
    %v630 = vpop.f32.mrb[0].mxu0
    %v631 = vadd.f32 %v381, %v630
    %632 = vmatprep.mubr.f32.mxu0 0.0
    %633 = vmatmul.mubr.f32.gmra.mrb[0].mxu0 %v424
    %v634 = vpop.f32.mrb[0].mxu0
    %v635 = vadd.f32 %v377, %v634
    %v636 = vpop.f32.mrb[0].mxu0
    %v637 = vadd.f32 %v381, %v636
    %638 = vmatprep.mubr.f32.mxu0 0.0
    %639 = vmatmul.mubr.f32.gmra.mrb[0].mxu0 %v426
    %v640 = vpop.f32.mrb[0].mxu0
    %v641 = vadd.f32 %v377, %v640
    %v642 = vpop.f32.mrb[0].mxu0
    %v643 = vadd.f32 %v381, %v642
    %644 = vmatprep.mubr.f32.mxu0 0.0
    %645 = vmatmul.mubr.f32.gmra.mrb[0].mxu0 %v428
    %v646 = vpop.f32.mrb[0].mxu0
    %v647 = vadd.f32 %v377, %v646
    %v648 = vpop.f32.mrb[0].mxu0
    %v649 = vadd.f32 %v381, %v648
    %650 = vmatprep.mubr.f32.mxu0 0.0
    %651 = vmatmul.mubr.f32.gmra.mrb[0].mxu0 %v430
    %v652 = vpop.f32.mrb[0].mxu0
    %v653 = vadd.f32 %v377, %v652
    %v654 = vpop.f32.mrb[0].mxu0
    %v655 = vadd.f32 %v381, %v654
    %656 = vmatprep.mubr.f32.mxu0 0.0
    %657 = vmatmul.mubr.f32.gmra.mrb[0].mxu0 %v432
    %v658 = vpop.f32.mrb[0].mxu0
    %v659 = vadd.f32 %v377, %v658
    %v660 = vpop.f32.mrb[0].mxu0
    %v661 = vadd.f32 %v381, %v660
    %662 = vmatprep.mubr.f32.mxu0 0.0
    %663 = vmatmul.mubr.f32.gmra.mrb[0].mxu0 %v434
    %v664 = vpop.f32.mrb[0].mxu0
    %v665 = vadd.f32 %v377, %v664
    %v666 = vpop.f32.mrb[0].mxu0
    %v667 = vadd.f32 %v381, %v666
    %668 = vmatprep.mubr.f32.mxu0 0.0
    %669 = vmatmul.mubr.f32.gmra.mrb[0].mxu0 %v436
    %v670 = vpop.f32.mrb[0].mxu0
    %v671 = vadd.f32 %v377, %v670
    %v672 = vpop.f32.mrb[0].mxu0
    %v673 = vadd.f32 %v381, %v672
    %674 = vmatprep.mubr.f32.mxu0 0.0
    %675 = vmatmul.mubr.f32.gmra.mrb[0].mxu0 %v438
    %v676 = vpop.f32.mrb[0].mxu0
    %v677 = vadd.f32 %v377, %v676
    %v678 = vpop.f32.mrb[0].mxu0
    %v679 = vadd.f32 %v381, %v678
    %680 = vmatprep.mubr.f32.mxu0 0.0
    %681 = vmatmul.mubr.f32.gmra.mrb[0].mxu0 %v440
    %v682 = vpop.f32.mrb[0].mxu0
    %v683 = vadd.f32 %v377, %v682
    %v684 = vpop.f32.mrb[0].mxu0
    %v685 = vadd.f32 %v381, %v684
    %686 = vmatprep.mubr.f32.mxu0 0.0
    %687 = vmatmul.mubr.f32.gmra.mrb[0].mxu0 %v442
    %v688 = vpop.f32.mrb[0].mxu0
    %v689 = vadd.f32 %v377, %v688
    %v690 = vpop.f32.mrb[0].mxu0
    %v691 = vadd.f32 %v381, %v690
    %692 = vmatprep.mubr.f32.mxu0 0.0
    %693 = vmatmul.mubr.f32.gmra.mrb[0].mxu0 %v444
    %v694 = vpop.f32.mrb[0].mxu0
    %v695 = vadd.f32 %v377, %v694
    %v696 = vpop.f32.mrb[0].mxu0
    %v697 = vadd.f32 %v381, %v696
    %698 = vmatprep.mubr.f32.mxu0 0.0
    %699 = vmatmul.mubr.f32.gmra.mrb[0].mxu0 %v446
    %v700 = vpop.f32.mrb[0].mxu0
    %v701 = vadd.f32 %v377, %v700
    %v702 = vpop.f32.mrb[0].mxu0
    %v703 = vadd.f32 %v381, %v702
    %704 = vdwg.mxu0
    %v705 = vmax.f32 %v515, %v517
    %706 = vmax.xlane.f32.xlu0 %v705
    %v707 = vpop.xlane.xlu0 %706
    %v708 = vmax.f32 %v521, %v523
    %709 = vmax.xlane.f32.xlu0 %v708
    %v710 = vpop.xlane.xlu0 %709
    %v711 = vmax.f32 %v527, %v529
    %712 = vmax.xlane.f32.xlu0 %v711
    %v713 = vpop.xlane.xlu0 %712
    %v714 = vmax.f32 %v533, %v535
    %715 = vmax.xlane.f32.xlu0 %v714
    %v716 = vpop.xlane.xlu0 %715
    %v717 = vmax.f32 %v539, %v541
    %718 = vmax.xlane.f32.xlu0 %v717
    %v719 = vpop.xlane.xlu0 %718
    %v720 = vmax.f32 %v545, %v547
    %721 = vmax.xlane.f32.xlu0 %v720
    %v722 = vpop.xlane.xlu0 %721
    %v723 = vmax.f32 %v551, %v553
    %724 = vmax.xlane.f32.xlu0 %v723
    %v725 = vpop.xlane.xlu0 %724
    %v726 = vmax.f32 %v557, %v559
    %727 = vmax.xlane.f32.xlu0 %v726
    %v728 = vpop.xlane.xlu0 %727
    %v729 = vmax.f32 %v563, %v565
    %730 = vmax.xlane.f32.xlu0 %v729
    %v731 = vpop.xlane.xlu0 %730
    %v732 = vmax.f32 %v569, %v571
    %733 = vmax.xlane.f32.xlu0 %v732
    %v734 = vpop.xlane.xlu0 %733
    %v735 = vmax.f32 %v575, %v577
    %736 = vmax.xlane.f32.xlu0 %v735
    %v737 = vpop.xlane.xlu0 %736
    %v738 = vmax.f32 %v581, %v583
    %739 = vmax.xlane.f32.xlu0 %v738
    %v740 = vpop.xlane.xlu0 %739
    %v741 = vmax.f32 %v587, %v589
    %742 = vmax.xlane.f32.xlu0 %v741
    %v743 = vpop.xlane.xlu0 %742
    %v744 = vmax.f32 %v593, %v595
    %745 = vmax.xlane.f32.xlu0 %v744
    %v746 = vpop.xlane.xlu0 %745
    %v747 = vmax.f32 %v599, %v601
    %748 = vmax.xlane.f32.xlu0 %v747
    %v749 = vpop.xlane.xlu0 %748
    %v750 = vmax.f32 %v605, %v607
    %751 = vmax.xlane.f32.xlu0 %v750
    %v752 = vpop.xlane.xlu0 %751
    %v753 = vmax.f32 %v611, %v613
    %754 = vmax.xlane.f32.xlu0 %v753
    %v755 = vpop.xlane.xlu0 %754
    %v756 = vmax.f32 %v617, %v619
    %757 = vmax.xlane.f32.xlu0 %v756
    %v758 = vpop.xlane.xlu0 %757
    %v759 = vmax.f32 %v623, %v625
    %760 = vmax.xlane.f32.xlu0 %v759
    %v761 = vpop.xlane.xlu0 %760
    %v762 = vmax.f32 %v629, %v631
    %763 = vmax.xlane.f32.xlu0 %v762
    %v764 = vpop.xlane.xlu0 %763
    %v765 = vmax.f32 %v635, %v637
    %766 = vmax.xlane.f32.xlu0 %v765
    %v767 = vpop.xlane.xlu0 %766
    %v768 = vmax.f32 %v641, %v643
    %769 = vmax.xlane.f32.xlu0 %v768
    %v770 = vpop.xlane.xlu0 %769
    %v771 = vmax.f32 %v647, %v649
    %772 = vmax.xlane.f32.xlu0 %v771
    %v773 = vpop.xlane.xlu0 %772
    %v774 = vmax.f32 %v653, %v655
    %775 = vmax.xlane.f32.xlu0 %v774
    %v776 = vpop.xlane.xlu0 %775
    %v777 = vmax.f32 %v659, %v661
    %778 = vmax.xlane.f32.xlu0 %v777
    %v779 = vpop.xlane.xlu0 %778
    %v780 = vmax.f32 %v665, %v667
    %781 = vmax.xlane.f32.xlu0 %v780
    %v782 = vpop.xlane.xlu0 %781
    %v783 = vmax.f32 %v671, %v673
    %784 = vmax.xlane.f32.xlu0 %v783
    %v785 = vpop.xlane.xlu0 %784
    %v786 = vmax.f32 %v677, %v679
    %787 = vmax.xlane.f32.xlu0 %v786
    %v788 = vpop.xlane.xlu0 %787
    %v789 = vmax.f32 %v683, %v685
    %790 = vmax.xlane.f32.xlu0 %v789
    %v791 = vpop.xlane.xlu0 %790
    %v792 = vmax.f32 %v689, %v691
    %793 = vmax.xlane.f32.xlu0 %v792
    %v794 = vpop.xlane.xlu0 %793
    %v795 = vmax.f32 %v695, %v697
    %796 = vmax.xlane.f32.xlu0 %v795
    %v797 = vpop.xlane.xlu0 %796
    %v798 = vmax.f32 %v701, %v703
    %799 = vmax.xlane.f32.xlu0 %v798
    %v800 = vpop.xlane.xlu0 %799
    %v801 = vsub.f32 %v515, %v707
    %v802 = vsub.f32 %v517, %v707
    %v803 = vsub.f32 %v521, %v710
    %v804 = vsub.f32 %v523, %v710
    %v805 = vsub.f32 %v527, %v713
    %v806 = vsub.f32 %v529, %v713
    %v807 = vsub.f32 %v533, %v716
    %v808 = vsub.f32 %v535, %v716
    %v809 = vsub.f32 %v539, %v719
    %v810 = vsub.f32 %v541, %v719
    %v811 = vsub.f32 %v545, %v722
    %v812 = vsub.f32 %v547, %v722
    %v813 = vsub.f32 %v551, %v725
    %v814 = vsub.f32 %v553, %v725
    %v815 = vsub.f32 %v557, %v728
    %v816 = vsub.f32 %v559, %v728
    %v817 = vsub.f32 %v563, %v731
    %v818 = vsub.f32 %v565, %v731
    %v819 = vsub.f32 %v569, %v734
    %v820 = vsub.f32 %v571, %v734
    %v821 = vsub.f32 %v575, %v737
    %v822 = vsub.f32 %v577, %v737
    %v823 = vsub.f32 %v581, %v740
    %v824 = vsub.f32 %v583, %v740
    %v825 = vsub.f32 %v587, %v743
    %v826 = vsub.f32 %v589, %v743
    %v827 = vsub.f32 %v593, %v746
    %v828 = vsub.f32 %v595, %v746
    %v829 = vsub.f32 %v599, %v749
    %v830 = vsub.f32 %v601, %v749
    %v831 = vsub.f32 %v605, %v752
    %v832 = vsub.f32 %v607, %v752
    %v833 = vsub.f32 %v611, %v755
    %v834 = vsub.f32 %v613, %v755
    %v835 = vsub.f32 %v617, %v758
    %v836 = vsub.f32 %v619, %v758
    %v837 = vsub.f32 %v623, %v761
    %v838 = vsub.f32 %v625, %v761
    %v839 = vsub.f32 %v629, %v764
    %v840 = vsub.f32 %v631, %v764
    %v841 = vsub.f32 %v635, %v767
    %v842 = vsub.f32 %v637, %v767
    %v843 = vsub.f32 %v641, %v770
    %v844 = vsub.f32 %v643, %v770
    %v845 = vsub.f32 %v647, %v773
    %v846 = vsub.f32 %v649, %v773
    %v847 = vsub.f32 %v653, %v776
    %v848 = vsub.f32 %v655, %v776
    %v849 = vsub.f32 %v659, %v779
    %v850 = vsub.f32 %v661, %v779
    %v851 = vsub.f32 %v665, %v782
    %v852 = vsub.f32 %v667, %v782
    %v853 = vsub.f32 %v671, %v785
    %v854 = vsub.f32 %v673, %v785
    %v855 = vsub.f32 %v677, %v788
    %v856 = vsub.f32 %v679, %v788
    %v857 = vsub.f32 %v683, %v791
    %v858 = vsub.f32 %v685, %v791
    %v859 = vsub.f32 %v689, %v794
    %v860 = vsub.f32 %v691, %v794
    %v861 = vsub.f32 %v695, %v797
    %v862 = vsub.f32 %v697, %v797
    %v863 = vsub.f32 %v701, %v800
    %v864 = vsub.f32 %v703, %v800
    %v865 = vmul.f32 %v801, 1.442695
    %v866 = vpow.pop %v865
    %v867 = vmul.f32 %v802, 1.442695
    %v868 = vpow.pop %v867
    %v869 = vmul.f32 %v803, 1.442695
    %v870 = vpow.pop %v869
    %v871 = vmul.f32 %v804, 1.442695
    %v872 = vpow.pop %v871
    %v873 = vmul.f32 %v805, 1.442695
    %v874 = vpow.pop %v873
    %v875 = vmul.f32 %v806, 1.442695
    %v876 = vpow.pop %v875
    %v877 = vmul.f32 %v807, 1.442695
    %v878 = vpow.pop %v877
    %v879 = vmul.f32 %v808, 1.442695
    %v880 = vpow.pop %v879
    %v881 = vmul.f32 %v809, 1.442695
    %v882 = vpow.pop %v881
    %v883 = vmul.f32 %v810, 1.442695
    %v884 = vpow.pop %v883
    %v885 = vmul.f32 %v811, 1.442695
    %v886 = vpow.pop %v885
    %v887 = vmul.f32 %v812, 1.442695
    %v888 = vpow.pop %v887
    %v889 = vmul.f32 %v813, 1.442695
    %v890 = vpow.pop %v889
    %v891 = vmul.f32 %v814, 1.442695
    %v892 = vpow.pop %v891
    %v893 = vmul.f32 %v815, 1.442695
    %v894 = vpow.pop %v893
    %v895 = vmul.f32 %v816, 1.442695
    %v896 = vpow.pop %v895
    %v897 = vmul.f32 %v817, 1.442695
    %v898 = vpow.pop %v897
    %v899 = vmul.f32 %v818, 1.442695
    %v900 = vpow.pop %v899
    %v901 = vmul.f32 %v819, 1.442695
    %v902 = vpow.pop %v901
    %v903 = vmul.f32 %v820, 1.442695
    %v904 = vpow.pop %v903
    %v905 = vmul.f32 %v821, 1.442695
    %v906 = vpow.pop %v905
    %v907 = vmul.f32 %v822, 1.442695
    %v908 = vpow.pop %v907
    %v909 = vmul.f32 %v823, 1.442695
    %v910 = vpow.pop %v909
    %v911 = vmul.f32 %v824, 1.442695
    %v912 = vpow.pop %v911
    %v913 = vmul.f32 %v825, 1.442695
    %v914 = vpow.pop %v913
    %v915 = vmul.f32 %v826, 1.442695
    %v916 = vpow.pop %v915
    %v917 = vmul.f32 %v827, 1.442695
    %v918 = vpow.pop %v917
    %v919 = vmul.f32 %v828, 1.442695
    %v920 = vpow.pop %v919
    %v921 = vmul.f32 %v829, 1.442695
    %v922 = vpow.pop %v921
    %v923 = vmul.f32 %v830, 1.442695
    %v924 = vpow.pop %v923
    %v925 = vmul.f32 %v831, 1.442695
    %v926 = vpow.pop %v925
    %v927 = vmul.f32 %v832, 1.442695
    %v928 = vpow.pop %v927
    %v929 = vmul.f32 %v833, 1.442695
    %v930 = vpow.pop %v929
    %v931 = vmul.f32 %v834, 1.442695
    %v932 = vpow.pop %v931
    %v933 = vmul.f32 %v835, 1.442695
    %v934 = vpow.pop %v933
    %v935 = vmul.f32 %v836, 1.442695
    %v936 = vpow.pop %v935
    %v937 = vmul.f32 %v837, 1.442695
    %v938 = vpow.pop %v937
    %v939 = vmul.f32 %v838, 1.442695
    %v940 = vpow.pop %v939
    %v941 = vmul.f32 %v839, 1.442695
    %v942 = vpow.pop %v941
    %v943 = vmul.f32 %v840, 1.442695
    %v944 = vpow.pop %v943
    %v945 = vmul.f32 %v841, 1.442695
    %v946 = vpow.pop %v945
    %v947 = vmul.f32 %v842, 1.442695
    %v948 = vpow.pop %v947
    %v949 = vmul.f32 %v843, 1.442695
    %v950 = vpow.pop %v949
    %v951 = vmul.f32 %v844, 1.442695
    %v952 = vpow.pop %v951
    %v953 = vmul.f32 %v845, 1.442695
    %v954 = vpow.pop %v953
    %v955 = vmul.f32 %v846, 1.442695
    %v956 = vpow.pop %v955
    %v957 = vmul.f32 %v847, 1.442695
    %v958 = vpow.pop %v957
    %v959 = vmul.f32 %v848, 1.442695
    %v960 = vpow.pop %v959
    %v961 = vmul.f32 %v849, 1.442695
    %v962 = vpow.pop %v961
    %v963 = vmul.f32 %v850, 1.442695
    %v964 = vpow.pop %v963
    %v965 = vmul.f32 %v851, 1.442695
    %v966 = vpow.pop %v965
    %v967 = vmul.f32 %v852, 1.442695
    %v968 = vpow.pop %v967
    %v969 = vmul.f32 %v853, 1.442695
    %v970 = vpow.pop %v969
    %v971 = vmul.f32 %v854, 1.442695
    %v972 = vpow.pop %v971
    %v973 = vmul.f32 %v855, 1.442695
    %v974 = vpow.pop %v973
    %v975 = vmul.f32 %v856, 1.442695
    %v976 = vpow.pop %v975
    %v977 = vmul.f32 %v857, 1.442695
    %v978 = vpow.pop %v977
    %v979 = vmul.f32 %v858, 1.442695
    %v980 = vpow.pop %v979
    %v981 = vmul.f32 %v859, 1.442695
    %v982 = vpow.pop %v981
    %v983 = vmul.f32 %v860, 1.442695
    %v984 = vpow.pop %v983
    %v985 = vmul.f32 %v861, 1.442695
    %v986 = vpow.pop %v985
    %v987 = vmul.f32 %v862, 1.442695
    %v988 = vpow.pop %v987
    %v989 = vmul.f32 %v863, 1.442695
    %v990 = vpow.pop %v989
    %v991 = vmul.f32 %v864, 1.442695
    %v992 = vpow.pop %v991
    %v993 = vadd.f32 %v866, %v868
    %994 = vadd.xlane.f32.xlu0 %v993
    %v995 = vpop.xlane.xlu0 %994
    %v996 = vadd.f32 %v870, %v872
    %997 = vadd.xlane.f32.xlu0 %v996
    %v998 = vpop.xlane.xlu0 %997
    %v999 = vadd.f32 %v874, %v876
    %1000 = vadd.xlane.f32.xlu0 %v999
    %v1001 = vpop.xlane.xlu0 %1000
    %v1002 = vadd.f32 %v878, %v880
    %1003 = vadd.xlane.f32.xlu0 %v1002
    %v1004 = vpop.xlane.xlu0 %1003
    %v1005 = vadd.f32 %v882, %v884
    %1006 = vadd.xlane.f32.xlu0 %v1005
    %v1007 = vpop.xlane.xlu0 %1006
    %v1008 = vadd.f32 %v886, %v888
    %1009 = vadd.xlane.f32.xlu0 %v1008
    %v1010 = vpop.xlane.xlu0 %1009
    %v1011 = vadd.f32 %v890, %v892
    %1012 = vadd.xlane.f32.xlu0 %v1011
    %v1013 = vpop.xlane.xlu0 %1012
    %v1014 = vadd.f32 %v894, %v896
    %1015 = vadd.xlane.f32.xlu0 %v1014
    %v1016 = vpop.xlane.xlu0 %1015
    %v1017 = vadd.f32 %v898, %v900
    %1018 = vadd.xlane.f32.xlu0 %v1017
    %v1019 = vpop.xlane.xlu0 %1018
    %v1020 = vadd.f32 %v902, %v904
    %1021 = vadd.xlane.f32.xlu0 %v1020
    %v1022 = vpop.xlane.xlu0 %1021
    %v1023 = vadd.f32 %v906, %v908
    %1024 = vadd.xlane.f32.xlu0 %v1023
    %v1025 = vpop.xlane.xlu0 %1024
    %v1026 = vadd.f32 %v910, %v912
    %1027 = vadd.xlane.f32.xlu0 %v1026
    %v1028 = vpop.xlane.xlu0 %1027
    %v1029 = vadd.f32 %v914, %v916
    %1030 = vadd.xlane.f32.xlu0 %v1029
    %v1031 = vpop.xlane.xlu0 %1030
    %v1032 = vadd.f32 %v918, %v920
    %1033 = vadd.xlane.f32.xlu0 %v1032
    %v1034 = vpop.xlane.xlu0 %1033
    %v1035 = vadd.f32 %v922, %v924
    %1036 = vadd.xlane.f32.xlu0 %v1035
    %v1037 = vpop.xlane.xlu0 %1036
    %v1038 = vadd.f32 %v926, %v928
    %1039 = vadd.xlane.f32.xlu0 %v1038
    %v1040 = vpop.xlane.xlu0 %1039
    %v1041 = vadd.f32 %v930, %v932
    %1042 = vadd.xlane.f32.xlu0 %v1041
    %v1043 = vpop.xlane.xlu0 %1042
    %v1044 = vadd.f32 %v934, %v936
    %1045 = vadd.xlane.f32.xlu0 %v1044
    %v1046 = vpop.xlane.xlu0 %1045
    %v1047 = vadd.f32 %v938, %v940
    %1048 = vadd.xlane.f32.xlu0 %v1047
    %v1049 = vpop.xlane.xlu0 %1048
    %v1050 = vadd.f32 %v942, %v944
    %1051 = vadd.xlane.f32.xlu0 %v1050
    %v1052 = vpop.xlane.xlu0 %1051
    %v1053 = vadd.f32 %v946, %v948
    %1054 = vadd.xlane.f32.xlu0 %v1053
    %v1055 = vpop.xlane.xlu0 %1054
    %v1056 = vadd.f32 %v950, %v952
    %1057 = vadd.xlane.f32.xlu0 %v1056
    %v1058 = vpop.xlane.xlu0 %1057
    %v1059 = vadd.f32 %v954, %v956
    %1060 = vadd.xlane.f32.xlu0 %v1059
    %v1061 = vpop.xlane.xlu0 %1060
    %v1062 = vadd.f32 %v958, %v960
    %1063 = vadd.xlane.f32.xlu0 %v1062
    %v1064 = vpop.xlane.xlu0 %1063
    %v1065 = vadd.f32 %v962, %v964
    %1066 = vadd.xlane.f32.xlu0 %v1065
    %v1067 = vpop.xlane.xlu0 %1066
    %v1068 = vadd.f32 %v966, %v968
    %1069 = vadd.xlane.f32.xlu0 %v1068
    %v1070 = vpop.xlane.xlu0 %1069
    %v1071 = vadd.f32 %v970, %v972
    %1072 = vadd.xlane.f32.xlu0 %v1071
    %v1073 = vpop.xlane.xlu0 %1072
    %v1074 = vadd.f32 %v974, %v976
    %1075 = vadd.xlane.f32.xlu0 %v1074
    %v1076 = vpop.xlane.xlu0 %1075
    %v1077 = vadd.f32 %v978, %v980
    %1078 = vadd.xlane.f32.xlu0 %v1077
    %v1079 = vpop.xlane.xlu0 %1078
    %v1080 = vadd.f32 %v982, %v984
    %1081 = vadd.xlane.f32.xlu0 %v1080
    %v1082 = vpop.xlane.xlu0 %1081
    %v1083 = vadd.f32 %v986, %v988
    %1084 = vadd.xlane.f32.xlu0 %v1083
    %v1085 = vpop.xlane.xlu0 %1084
    %v1086 = vadd.f32 %v990, %v992
    %1087 = vadd.xlane.f32.xlu0 %v1086
    %v1088 = vpop.xlane.xlu0 %1087
    %v1089 = vrcp.pop %v995
    %v1090 = vrcp.pop %v998
    %v1091 = vrcp.pop %v1001
    %v1092 = vrcp.pop %v1004
    %v1093 = vrcp.pop %v1007
    %v1094 = vrcp.pop %v1010
    %v1095 = vrcp.pop %v1013
    %v1096 = vrcp.pop %v1016
    %v1097 = vrcp.pop %v1019
    %v1098 = vrcp.pop %v1022
    %v1099 = vrcp.pop %v1025
    %v1100 = vrcp.pop %v1028
    %v1101 = vrcp.pop %v1031
    %v1102 = vrcp.pop %v1034
    %v1103 = vrcp.pop %v1037
    %v1104 = vrcp.pop %v1040
    %v1105 = vrcp.pop %v1043
    %v1106 = vrcp.pop %v1046
    %v1107 = vrcp.pop %v1049
    %v1108 = vrcp.pop %v1052
    %v1109 = vrcp.pop %v1055
    %v1110 = vrcp.pop %v1058
    %v1111 = vrcp.pop %v1061
    %v1112 = vrcp.pop %v1064
    %v1113 = vrcp.pop %v1067
    %v1114 = vrcp.pop %v1070
    %v1115 = vrcp.pop %v1073
    %v1116 = vrcp.pop %v1076
    %v1117 = vrcp.pop %v1079
    %v1118 = vrcp.pop %v1082
    %v1119 = vrcp.pop %v1085
    %v1120 = vrcp.pop %v1088
    %v1121 = vmul.f32 %v995, %v1089
    %v1122 = vmul.f32 %v998, %v1090
    %v1123 = vmul.f32 %v1001, %v1091
    %v1124 = vmul.f32 %v1004, %v1092
    %v1125 = vmul.f32 %v1007, %v1093
    %v1126 = vmul.f32 %v1010, %v1094
    %v1127 = vmul.f32 %v1013, %v1095
    %v1128 = vmul.f32 %v1016, %v1096
    %v1129 = vmul.f32 %v1019, %v1097
    %v1130 = vmul.f32 %v1022, %v1098
    %v1131 = vmul.f32 %v1025, %v1099
    %v1132 = vmul.f32 %v1028, %v1100
    %v1133 = vmul.f32 %v1031, %v1101
    %v1134 = vmul.f32 %v1034, %v1102
    %v1135 = vmul.f32 %v1037, %v1103
    %v1136 = vmul.f32 %v1040, %v1104
    %v1137 = vmul.f32 %v1043, %v1105
    %v1138 = vmul.f32 %v1046, %v1106
    %v1139 = vmul.f32 %v1049, %v1107
    %v1140 = vmul.f32 %v1052, %v1108
    %v1141 = vmul.f32 %v1055, %v1109
    %v1142 = vmul.f32 %v1058, %v1110
    %v1143 = vmul.f32 %v1061, %v1111
    %v1144 = vmul.f32 %v1064, %v1112
    %v1145 = vmul.f32 %v1067, %v1113
    %v1146 = vmul.f32 %v1070, %v1114
    %v1147 = vmul.f32 %v1073, %v1115
    %v1148 = vmul.f32 %v1076, %v1116
    %v1149 = vmul.f32 %v1079, %v1117
    %v1150 = vmul.f32 %v1082, %v1118
    %v1151 = vmul.f32 %v1085, %v1119
    %v1152 = vmul.f32 %v1088, %v1120
    %v1153 = vsub.f32 2.0, %v1121
    %v1154 = vsub.f32 2.0, %v1122
    %v1155 = vsub.f32 2.0, %v1123
    %v1156 = vsub.f32 2.0, %v1124
    %v1157 = vsub.f32 2.0, %v1125
    %v1158 = vsub.f32 2.0, %v1126
    %v1159 = vsub.f32 2.0, %v1127
    %v1160 = vsub.f32 2.0, %v1128
    %v1161 = vsub.f32 2.0, %v1129
    %v1162 = vsub.f32 2.0, %v1130
    %v1163 = vsub.f32 2.0, %v1131
    %v1164 = vsub.f32 2.0, %v1132
    %v1165 = vsub.f32 2.0, %v1133
    %v1166 = vsub.f32 2.0, %v1134
    %v1167 = vsub.f32 2.0, %v1135
    %v1168 = vsub.f32 2.0, %v1136
    %v1169 = vsub.f32 2.0, %v1137
    %v1170 = vsub.f32 2.0, %v1138
    %v1171 = vsub.f32 2.0, %v1139
    %v1172 = vsub.f32 2.0, %v1140
    %v1173 = vsub.f32 2.0, %v1141
    %v1174 = vsub.f32 2.0, %v1142
    %v1175 = vsub.f32 2.0, %v1143
    %v1176 = vsub.f32 2.0, %v1144
    %v1177 = vsub.f32 2.0, %v1145
    %v1178 = vsub.f32 2.0, %v1146
    %v1179 = vsub.f32 2.0, %v1147
    %v1180 = vsub.f32 2.0, %v1148
    %v1181 = vsub.f32 2.0, %v1149
    %v1182 = vsub.f32 2.0, %v1150
    %v1183 = vsub.f32 2.0, %v1151
    %v1184 = vsub.f32 2.0, %v1152
    %v1185 = vmul.f32 %v1089, %v1153
    %v1186 = vmul.f32 %v1090, %v1154
    %v1187 = vmul.f32 %v1091, %v1155
    %v1188 = vmul.f32 %v1092, %v1156
    %v1189 = vmul.f32 %v1093, %v1157
    %v1190 = vmul.f32 %v1094, %v1158
    %v1191 = vmul.f32 %v1095, %v1159
    %v1192 = vmul.f32 %v1096, %v1160
    %v1193 = vmul.f32 %v1097, %v1161
    %v1194 = vmul.f32 %v1098, %v1162
    %v1195 = vmul.f32 %v1099, %v1163
    %v1196 = vmul.f32 %v1100, %v1164
    %v1197 = vmul.f32 %v1101, %v1165
    %v1198 = vmul.f32 %v1102, %v1166
    %v1199 = vmul.f32 %v1103, %v1167
    %v1200 = vmul.f32 %v1104, %v1168
    %v1201 = vmul.f32 %v1105, %v1169
    %v1202 = vmul.f32 %v1106, %v1170
    %v1203 = vmul.f32 %v1107, %v1171
    %v1204 = vmul.f32 %v1108, %v1172
    %v1205 = vmul.f32 %v1109, %v1173
    %v1206 = vmul.f32 %v1110, %v1174
    %v1207 = vmul.f32 %v1111, %v1175
    %v1208 = vmul.f32 %v1112, %v1176
    %v1209 = vmul.f32 %v1113, %v1177
    %v1210 = vmul.f32 %v1114, %v1178
    %v1211 = vmul.f32 %v1115, %v1179
    %v1212 = vmul.f32 %v1116, %v1180
    %v1213 = vmul.f32 %v1117, %v1181
    %v1214 = vmul.f32 %v1118, %v1182
    %v1215 = vmul.f32 %v1119, %v1183
    %v1216 = vmul.f32 %v1120, %v1184
    %v1217 = vmul.f32 %v1185, %v300
    %v1218 = vmul.f32 %v1186, %v301
    %v1219 = vmul.f32 %v1187, %v302
    %v1220 = vmul.f32 %v1188, %v303
    %v1221 = vmul.f32 %v1189, %v304
    %v1222 = vmul.f32 %v1190, %v305
    %v1223 = vmul.f32 %v1191, %v306
    %v1224 = vmul.f32 %v1192, %v307
    %1226 = vset.pattern.permute.xlu0 0
    %1227 = vperm.xlu0 %1226, %v1217
    %v1228 = vpop.permute.xlu0 %1227
    %1231 = vset.pattern.permute.xlu0 0
    %1232 = vperm.xlu0 %1231, %v1218
    %v1233 = vpop.permute.xlu0 %1232
    %1236 = vset.pattern.permute.xlu0 0
    %1237 = vperm.xlu0 %1236, %v1219
    %v1238 = vpop.permute.xlu0 %1237
    %1241 = vset.pattern.permute.xlu0 0
    %1242 = vperm.xlu0 %1241, %v1220
    %v1243 = vpop.permute.xlu0 %1242
    %1246 = vset.pattern.permute.xlu0 0
    %1247 = vperm.xlu0 %1246, %v1221
    %v1248 = vpop.permute.xlu0 %1247
    %1251 = vset.pattern.permute.xlu0 0
    %1252 = vperm.xlu0 %1251, %v1222
    %v1253 = vpop.permute.xlu0 %1252
    %1256 = vset.pattern.permute.xlu0 0
    %1257 = vperm.xlu0 %1256, %v1223
    %v1258 = vpop.permute.xlu0 %1257
    %1261 = vset.pattern.permute.xlu0 0
    %1262 = vperm.xlu0 %1261, %v1224
    %v1263 = vpop.permute.xlu0 %1262
    %v1265 = vmul.f32 %v866, %v1228
    %v1266 = vmul.f32 %v868, %v1228
    %v1267 = vmul.f32 %v870, %v1233
    %v1268 = vmul.f32 %v872, %v1233
    %v1269 = vmul.f32 %v874, %v1238
    %v1270 = vmul.f32 %v876, %v1238
    %v1271 = vmul.f32 %v878, %v1243
    %v1272 = vmul.f32 %v880, %v1243
    %v1273 = vmul.f32 %v882, %v1248
    %v1274 = vmul.f32 %v884, %v1248
    %v1275 = vmul.f32 %v886, %v1253
    %v1276 = vmul.f32 %v888, %v1253
    %v1277 = vmul.f32 %v890, %v1258
    %v1278 = vmul.f32 %v892, %v1258
    %v1279 = vmul.f32 %v894, %v1263
    %v1280 = vmul.f32 %v896, %v1263
    %v1281 = vmul.f32 %v1193, %v300
    %v1282 = vmul.f32 %v1194, %v301
    %v1283 = vmul.f32 %v1195, %v302
    %v1284 = vmul.f32 %v1196, %v303
    %v1285 = vmul.f32 %v1197, %v304
    %v1286 = vmul.f32 %v1198, %v305
    %v1287 = vmul.f32 %v1199, %v306
    %v1288 = vmul.f32 %v1200, %v307
    %1290 = vset.pattern.permute.xlu0 1
    %1291 = vperm.xlu0 %1290, %v1281
    %v1292 = vpop.permute.xlu0 %1291
    %1295 = vset.pattern.permute.xlu0 1
    %1296 = vperm.xlu0 %1295, %v1282
    %v1297 = vpop.permute.xlu0 %1296
    %1300 = vset.pattern.permute.xlu0 1
    %1301 = vperm.xlu0 %1300, %v1283
    %v1302 = vpop.permute.xlu0 %1301
    %1305 = vset.pattern.permute.xlu0 1
    %1306 = vperm.xlu0 %1305, %v1284
    %v1307 = vpop.permute.xlu0 %1306
    %1310 = vset.pattern.permute.xlu0 1
    %1311 = vperm.xlu0 %1310, %v1285
    %v1312 = vpop.permute.xlu0 %1311
    %1315 = vset.pattern.permute.xlu0 1
    %1316 = vperm.xlu0 %1315, %v1286
    %v1317 = vpop.permute.xlu0 %1316
    %1320 = vset.pattern.permute.xlu0 1
    %1321 = vperm.xlu0 %1320, %v1287
    %v1322 = vpop.permute.xlu0 %1321
    %1325 = vset.pattern.permute.xlu0 1
    %1326 = vperm.xlu0 %1325, %v1288
    %v1327 = vpop.permute.xlu0 %1326
    %v1329 = vmul.f32 %v898, %v1292
    %v1330 = vmul.f32 %v900, %v1292
    %v1331 = vmul.f32 %v902, %v1297
    %v1332 = vmul.f32 %v904, %v1297
    %v1333 = vmul.f32 %v906, %v1302
    %v1334 = vmul.f32 %v908, %v1302
    %v1335 = vmul.f32 %v910, %v1307
    %v1336 = vmul.f32 %v912, %v1307
    %v1337 = vmul.f32 %v914, %v1312
    %v1338 = vmul.f32 %v916, %v1312
    %v1339 = vmul.f32 %v918, %v1317
    %v1340 = vmul.f32 %v920, %v1317
    %v1341 = vmul.f32 %v922, %v1322
    %v1342 = vmul.f32 %v924, %v1322
    %v1343 = vmul.f32 %v926, %v1327
    %v1344 = vmul.f32 %v928, %v1327
    %v1345 = vadd.f32 %v1265, %v1329
    %v1346 = vadd.f32 %v1266, %v1330
    %v1347 = vadd.f32 %v1267, %v1331
    %v1348 = vadd.f32 %v1268, %v1332
    %v1349 = vadd.f32 %v1269, %v1333
    %v1350 = vadd.f32 %v1270, %v1334
    %v1351 = vadd.f32 %v1271, %v1335
    %v1352 = vadd.f32 %v1272, %v1336
    %v1353 = vadd.f32 %v1273, %v1337
    %v1354 = vadd.f32 %v1274, %v1338
    %v1355 = vadd.f32 %v1275, %v1339
    %v1356 = vadd.f32 %v1276, %v1340
    %v1357 = vadd.f32 %v1277, %v1341
    %v1358 = vadd.f32 %v1278, %v1342
    %v1359 = vadd.f32 %v1279, %v1343
    %v1360 = vadd.f32 %v1280, %v1344
    %v1361 = vmul.f32 %v1201, %v300
    %v1362 = vmul.f32 %v1202, %v301
    %v1363 = vmul.f32 %v1203, %v302
    %v1364 = vmul.f32 %v1204, %v303
    %v1365 = vmul.f32 %v1205, %v304
    %v1366 = vmul.f32 %v1206, %v305
    %v1367 = vmul.f32 %v1207, %v306
    %v1368 = vmul.f32 %v1208, %v307
    %1370 = vset.pattern.permute.xlu0 2
    %1371 = vperm.xlu0 %1370, %v1361
    %v1372 = vpop.permute.xlu0 %1371
    %1375 = vset.pattern.permute.xlu0 2
    %1376 = vperm.xlu0 %1375, %v1362
    %v1377 = vpop.permute.xlu0 %1376
    %1380 = vset.pattern.permute.xlu0 2
    %1381 = vperm.xlu0 %1380, %v1363
    %v1382 = vpop.permute.xlu0 %1381
    %1385 = vset.pattern.permute.xlu0 2
    %1386 = vperm.xlu0 %1385, %v1364
    %v1387 = vpop.permute.xlu0 %1386
    %1390 = vset.pattern.permute.xlu0 2
    %1391 = vperm.xlu0 %1390, %v1365
    %v1392 = vpop.permute.xlu0 %1391
    %1395 = vset.pattern.permute.xlu0 2
    %1396 = vperm.xlu0 %1395, %v1366
    %v1397 = vpop.permute.xlu0 %1396
    %1400 = vset.pattern.permute.xlu0 2
    %1401 = vperm.xlu0 %1400, %v1367
    %v1402 = vpop.permute.xlu0 %1401
    %1405 = vset.pattern.permute.xlu0 2
    %1406 = vperm.xlu0 %1405, %v1368
    %v1407 = vpop.permute.xlu0 %1406
    %v1409 = vmul.f32 %v930, %v1372
    %v1410 = vmul.f32 %v932, %v1372
    %v1411 = vmul.f32 %v934, %v1377
    %v1412 = vmul.f32 %v936, %v1377
    %v1413 = vmul.f32 %v938, %v1382
    %v1414 = vmul.f32 %v940, %v1382
    %v1415 = vmul.f32 %v942, %v1387
    %v1416 = vmul.f32 %v944, %v1387
    %v1417 = vmul.f32 %v946, %v1392
    %v1418 = vmul.f32 %v948, %v1392
    %v1419 = vmul.f32 %v950, %v1397
    %v1420 = vmul.f32 %v952, %v1397
    %v1421 = vmul.f32 %v954, %v1402
    %v1422 = vmul.f32 %v956, %v1402
    %v1423 = vmul.f32 %v958, %v1407
    %v1424 = vmul.f32 %v960, %v1407
    %v1425 = vadd.f32 %v1345, %v1409
    %v1426 = vadd.f32 %v1346, %v1410
    %v1427 = vadd.f32 %v1347, %v1411
    %v1428 = vadd.f32 %v1348, %v1412
    %v1429 = vadd.f32 %v1349, %v1413
    %v1430 = vadd.f32 %v1350, %v1414
    %v1431 = vadd.f32 %v1351, %v1415
    %v1432 = vadd.f32 %v1352, %v1416
    %v1433 = vadd.f32 %v1353, %v1417
    %v1434 = vadd.f32 %v1354, %v1418
    %v1435 = vadd.f32 %v1355, %v1419
    %v1436 = vadd.f32 %v1356, %v1420
    %v1437 = vadd.f32 %v1357, %v1421
    %v1438 = vadd.f32 %v1358, %v1422
    %v1439 = vadd.f32 %v1359, %v1423
    %v1440 = vadd.f32 %v1360, %v1424
    %v1441 = vmul.f32 %v1209, %v300
    %v1442 = vmul.f32 %v1210, %v301
    %v1443 = vmul.f32 %v1211, %v302
    %v1444 = vmul.f32 %v1212, %v303
    %v1445 = vmul.f32 %v1213, %v304
    %v1446 = vmul.f32 %v1214, %v305
    %v1447 = vmul.f32 %v1215, %v306
    %v1448 = vmul.f32 %v1216, %v307
    %1450 = vset.pattern.permute.xlu0 3
    %1451 = vperm.xlu0 %1450, %v1441
    %v1452 = vpop.permute.xlu0 %1451
    %1455 = vset.pattern.permute.xlu0 3
    %1456 = vperm.xlu0 %1455, %v1442
    %v1457 = vpop.permute.xlu0 %1456
    %1460 = vset.pattern.permute.xlu0 3
    %1461 = vperm.xlu0 %1460, %v1443
    %v1462 = vpop.permute.xlu0 %1461
    %1465 = vset.pattern.permute.xlu0 3
    %1466 = vperm.xlu0 %1465, %v1444
    %v1467 = vpop.permute.xlu0 %1466
    %1470 = vset.pattern.permute.xlu0 3
    %1471 = vperm.xlu0 %1470, %v1445
    %v1472 = vpop.permute.xlu0 %1471
    %1475 = vset.pattern.permute.xlu0 3
    %1476 = vperm.xlu0 %1475, %v1446
    %v1477 = vpop.permute.xlu0 %1476
    %1480 = vset.pattern.permute.xlu0 3
    %1481 = vperm.xlu0 %1480, %v1447
    %v1482 = vpop.permute.xlu0 %1481
    %1485 = vset.pattern.permute.xlu0 3
    %1486 = vperm.xlu0 %1485, %v1448
    %v1487 = vpop.permute.xlu0 %1486
    %v1489 = vmul.f32 %v962, %v1452
    %v1490 = vmul.f32 %v964, %v1452
    %v1491 = vmul.f32 %v966, %v1457
    %v1492 = vmul.f32 %v968, %v1457
    %v1493 = vmul.f32 %v970, %v1462
    %v1494 = vmul.f32 %v972, %v1462
    %v1495 = vmul.f32 %v974, %v1467
    %v1496 = vmul.f32 %v976, %v1467
    %v1497 = vmul.f32 %v978, %v1472
    %v1498 = vmul.f32 %v980, %v1472
    %v1499 = vmul.f32 %v982, %v1477
    %v1500 = vmul.f32 %v984, %v1477
    %v1501 = vmul.f32 %v986, %v1482
    %v1502 = vmul.f32 %v988, %v1482
    %v1503 = vmul.f32 %v990, %v1487
    %v1504 = vmul.f32 %v992, %v1487
    %v1505 = vadd.f32 %v1425, %v1489
    %v1506 = vadd.f32 %v1426, %v1490
    %v1507 = vadd.f32 %v1427, %v1491
    %v1508 = vadd.f32 %v1428, %v1492
    %v1509 = vadd.f32 %v1429, %v1493
    %v1510 = vadd.f32 %v1430, %v1494
    %v1511 = vadd.f32 %v1431, %v1495
    %v1512 = vadd.f32 %v1432, %v1496
    %v1513 = vadd.f32 %v1433, %v1497
    %v1514 = vadd.f32 %v1434, %v1498
    %v1515 = vadd.f32 %v1435, %v1499
    %v1516 = vadd.f32 %v1436, %v1500
    %v1517 = vadd.f32 %v1437, %v1501
    %v1518 = vadd.f32 %v1438, %v1502
    %v1519 = vadd.f32 %v1439, %v1503
    %v1520 = vadd.f32 %v1440, %v1504
    %v1521 = vadd.f32 %v1505, 1e-08
    %v1522 = vadd.f32 %v1506, 1e-08
    %v1523 = vadd.f32 %v1507, 1e-08
    %v1524 = vadd.f32 %v1508, 1e-08
    %v1525 = vadd.f32 %v1509, 1e-08
    %v1526 = vadd.f32 %v1510, 1e-08
    %v1527 = vadd.f32 %v1511, 1e-08
    %v1528 = vadd.f32 %v1512, 1e-08
    %v1529 = vadd.f32 %v1513, 1e-08
    %v1530 = vadd.f32 %v1514, 1e-08
    %v1531 = vadd.f32 %v1515, 1e-08
    %v1532 = vadd.f32 %v1516, 1e-08
    %v1533 = vadd.f32 %v1517, 1e-08
    %v1534 = vadd.f32 %v1518, 1e-08
    %v1535 = vadd.f32 %v1519, 1e-08
    %v1536 = vadd.f32 %v1520, 1e-08
    %v1537 = vlog2.pop %v1521
    %v1538 = vmul.f32 %v1537, 0.6931472
    %v1539 = vlog2.pop %v1522
    %v1540 = vmul.f32 %v1539, 0.6931472
    %v1541 = vlog2.pop %v1523
    %v1542 = vmul.f32 %v1541, 0.6931472
    %v1543 = vlog2.pop %v1524
    %v1544 = vmul.f32 %v1543, 0.6931472
    %v1545 = vlog2.pop %v1525
    %v1546 = vmul.f32 %v1545, 0.6931472
    %v1547 = vlog2.pop %v1526
    %v1548 = vmul.f32 %v1547, 0.6931472
    %v1549 = vlog2.pop %v1527
    %v1550 = vmul.f32 %v1549, 0.6931472
    %v1551 = vlog2.pop %v1528
    %v1552 = vmul.f32 %v1551, 0.6931472
    %v1553 = vlog2.pop %v1529
    %v1554 = vmul.f32 %v1553, 0.6931472
    %v1555 = vlog2.pop %v1530
    %v1556 = vmul.f32 %v1555, 0.6931472
    %v1557 = vlog2.pop %v1531
    %v1558 = vmul.f32 %v1557, 0.6931472
    %v1559 = vlog2.pop %v1532
    %v1560 = vmul.f32 %v1559, 0.6931472
    %v1561 = vlog2.pop %v1533
    %v1562 = vmul.f32 %v1561, 0.6931472
    %v1563 = vlog2.pop %v1534
    %v1564 = vmul.f32 %v1563, 0.6931472
    %v1565 = vlog2.pop %v1535
    %v1566 = vmul.f32 %v1565, 0.6931472
    %v1567 = vlog2.pop %v1536
    %v1568 = vmul.f32 %v1567, 0.6931472
    %1569 = vst [vmem:[#allocation2] sm:$0xff] %v1538
    %1570 = vst [vmem:[#allocation2 + $0x8] sm:$0xff] %v1540
    %1571 = vst [vmem:[#allocation2 + $0x10] sm:$0xff] %v1542
    %1572 = vst [vmem:[#allocation2 + $0x18] sm:$0xff] %v1544
    %1573 = vst [vmem:[#allocation2 + $0x20] sm:$0xff] %v1546
    %1574 = vst [vmem:[#allocation2 + $0x28] sm:$0xff] %v1548
    %1575 = vst [vmem:[#allocation2 + $0x30] sm:$0xff] %v1550
    %1576 = vst [vmem:[#allocation2 + $0x38] sm:$0xff] %v1552
    %1577 = vst [vmem:[#allocation2 + $0x40] sm:$0xff] %v1554
    %1578 = vst [vmem:[#allocation2 + $0x48] sm:$0xff] %v1556
    %1579 = vst [vmem:[#allocation2 + $0x50] sm:$0xff] %v1558
    %1580 = vst [vmem:[#allocation2 + $0x58] sm:$0xff] %v1560
    %1581 = vst [vmem:[#allocation2 + $0x60] sm:$0xff] %v1562
    %1582 = vst [vmem:[#allocation2 + $0x68] sm:$0xff] %v1564
    %1583 = vst [vmem:[#allocation2 + $0x70] sm:$0xff] %v1566
    %1584 = vst [vmem:[#allocation2 + $0x78] sm:$0xff] %v1568
    // Predicated region
    $region22: #{_mos_call.1} parent=1 // pred_check
      _
    $region23: #{_mos_call.1} parent=1 // pred_check_branch
      %1586 = sbr.rel (0) target = $region25
    $region24: #{_mos_call.1} parent=1 // pred_region
      %s1588 = ssub.s32 2048, 2048
      %1589 = vsyncadd [#allocation3], %s1588
      %s1590 = sshll.u32 [#allocation2], 4
      %s1591 = int_to_ptr.vmem [resolvable:$true] %s1590
      %1596 = dma.vmem_to_hbm [thread:$0]  %s1591, 2048, %s5, [#allocation3], 256, 256, 16
    $region25: #{_mos_call.1} parent=1 // pred_fallthru
      _
    // Predicated region
    $region26: #{_mos_call.1} parent=1 // pred_check
      _
    $region27: #{_mos_call.1} parent=1 // pred_check_branch
      %1598 = sbr.rel (0) target = $region29
    $region28: #{_mos_call.1} parent=1 // pred_region
      %1599 = dma.done [#allocation3], 2048
    $region29: #{_mos_call.1} parent=1 // pred_fallthru
      _
    %1600 = vsyncpa [#allocation3], 1

</llo_original>
